<compile_context>
chip_gen: v7x
topology: tpu7x:2x2x1
jax: 0.10.0
libtpu: 0.0.40
codegen_flags: <defaults>
</compile_context>

<pallas_src>
import functools

import jax
import jax.numpy as jnp
import numpy as np
from jax.experimental import pallas as pl
from jax.experimental.pallas import tpu as pltpu


def _self_attention_kernel(q_ref, k_ref, v_ref, w_qkv_ref, wo_ref, bo_ref, o_ref,
                           *, heads, mxu_dtype):
    """Self-attention for one batch block.

    Ref shapes (B = batch_block):
      q_ref/k_ref/v_ref : (B, Lq|Lk|Lv, E)   natural (N, L, E) layout, E on lanes
      w_qkv_ref         : (E, 3E)  horizontally stacked block-diagonal weights
                                   [Wq_bd * 1/sqrt(E) | Wk_bd | Wv_bd], (in, out)
      wo_ref            : (E, E)   fc_out weight, pre-transposed (in, out)
      bo_ref            : (1, E)   fc_out bias
      o_ref             : (B*Lq, E)
    """
    B, Lq, E = q_ref.shape
    Lk = k_ref.shape[1]
    Lv = v_ref.shape[1]
    D = E // heads
    Ltot = Lq + Lk + Lv

    # --- Fused Q/K/V projection: one MXU push instead of three.
    # Aligned sublane concat along the sequence axis (handles Lq != Lk != Lv);
    # the stacked weight projects every row with all three block-diagonal
    # per-head weights, and the block belonging to each row group is sliced out
    # below.  The zero-block FLOPs are free: the MXU is idle at these shapes.
    x = jnp.concatenate([q_ref[...], k_ref[...], v_ref[...]], axis=1)      # (B, Ltot, E)
    proj = jnp.dot(x.reshape(B * Ltot, E).astype(mxu_dtype),
                   w_qkv_ref[...].astype(mxu_dtype),
                   preferred_element_type=jnp.float32)                      # (B*Ltot, 3E)
    proj = proj.reshape(B, Ltot, 3 * E)

    # --- Per-head attention (H small & static).  Scores contract the head dim
    # directly ('bqd,bkd->bqk'): no k transpose on the XLU.
    ctxs = []
    for h in range(heads):
        lo = h * D
        q_h = proj[:, :Lq, lo:lo + D]                               # (B, Lq, D), pre-scaled
        k_h = proj[:, Lq:Lq + Lk, E + lo:E + lo + D]                # (B, Lk, D)
        v_h = proj[:, Lq + Lk:Ltot, 2 * E + lo:2 * E + lo + D]      # (B, Lv, D)

        s = jnp.einsum('bqd,bkd->bqk',
                       q_h.astype(mxu_dtype), k_h.astype(mxu_dtype),
                       preferred_element_type=jnp.float32)           # (B, Lq, Lk)

        # Numerically-stable softmax over keys; exact reciprocal (VPU slack).
        m = jnp.max(s, axis=-1, keepdims=True)
        e = jnp.exp(s - m)
        denom = jnp.sum(e, axis=-1, keepdims=True)
        attn = e * pl.reciprocal(denom, approx=False)

        ctx = jnp.einsum('bqk,bkd->bqd',
                         attn.astype(mxu_dtype), v_h.astype(mxu_dtype),
                         preferred_element_type=jnp.float32)          # (B, Lq, D)
        ctxs.append(ctx.reshape(B * Lq, D))

    # --- Head concat + single fc_out matmul (replaces 4 sub-tile dots + 4 adds).
    ctx_all = jnp.concatenate(ctxs, axis=-1)                          # (B*Lq, E)
    out = jnp.dot(ctx_all.astype(mxu_dtype), wo_ref[...].astype(mxu_dtype),
                  preferred_element_type=jnp.float32) + bo_ref[...]
    o_ref[...] = out.astype(o_ref.dtype)


def _tensorcores_per_chip():
    """2 TensorCores/chip on v7x, 1 on v5e/v6e (best-effort, defaults to 1)."""
    try:
        kind = jax.devices()[0].device_kind.lower()
    except Exception:
        return 1
    return 2 if ("v7" in kind or "tpu7" in kind) else 1


def prepare_params(params, heads):
    """One-time conversion of PyTorch-shaped weights into fused kernel weights.

    nn.Linear stores weight as (out, in) and computes x @ W.T; pre-transpose and
    expand each per-head (D, D) projection to block-diagonal (E, E) so all heads
    project in one matmul; fold 1/sqrt(E) into the Q block; stack [Wq | Wk | Wv]
    horizontally so a single (rows, E) @ (E, 3E) matmul projects Q, K and V.
    """
    E = params["wo"].shape[0]
    D = E // heads
    assert D * heads == E, "embeddings_size must be divisible by heads"
    eye_h = jnp.eye(heads, dtype=jnp.float32)
    scale = 1.0 / (float(E) ** 0.5)
    wq_bd = jnp.kron(eye_h, params["wq"].T) * scale
    wk_bd = jnp.kron(eye_h, params["wk"].T)
    wv_bd = jnp.kron(eye_h, params["wv"].T)
    w_qkv = jnp.concatenate([wq_bd, wk_bd, wv_bd], axis=1)            # (E, 3E)
    return {
        "w_qkv": w_qkv,
        "wo_t": params["wo"].T,                                       # (E, E), (in, out)
        "bo": params["bo"].reshape(1, E),
    }


def self_attention_pallas(values, keys, query, prepared, *, heads,
                          batch_block=None, use_bf16=False):
    """values/keys/query: (N, L, E) float32; prepared: output of prepare_params."""
    N, Lv, E = values.shape
    Lk = keys.shape[1]
    Lq = query.shape[1]
    D = E // heads
    assert D * heads == E, "embeddings_size must be divisible by heads"

    if batch_block is None:
        # One fat grid step on single-TensorCore chips (v5e/v6e); split the
        # batch axis across v7x's two TensorCores when possible.  The working
        # set here is KB-scale, so VMEM is never the constraint; re-derive this
        # (and vmem_limit_bytes) against v7x's 64 MiB VMEM once shapes grow.
        batch_block = N // 2 if (_tensorcores_per_chip() >= 2 and N % 2 == 0) else N
    assert N % batch_block == 0
    grid = (N // batch_block,)

    mxu_dtype = jnp.bfloat16 if use_bf16 else jnp.float32
    kernel = functools.partial(_self_attention_kernel, heads=heads, mxu_dtype=mxu_dtype)

    in_specs = [
        pl.BlockSpec((batch_block, Lq, E), lambda n: (n, 0, 0)),      # query
        pl.BlockSpec((batch_block, Lk, E), lambda n: (n, 0, 0)),      # keys
        pl.BlockSpec((batch_block, Lv, E), lambda n: (n, 0, 0)),      # values
        pl.BlockSpec((E, 3 * E), lambda n: (0, 0)),                   # [Wq|Wk|Wv] fused
        pl.BlockSpec((E, E), lambda n: (0, 0)),                       # Wout^T
        pl.BlockSpec((1, E), lambda n: (0, 0)),                       # b_out
    ]
    out_specs = pl.BlockSpec((batch_block * Lq, E), lambda n: (n, 0))

    out_flat = pl.pallas_call(
        kernel,
        grid=grid,
        in_specs=in_specs,
        out_specs=out_specs,
        out_shape=jax.ShapeDtypeStruct((N * Lq, E), jnp.float32),
        compiler_params=pltpu.CompilerParams(dimension_semantics=("parallel",)),
    )(query, keys, values, prepared["w_qkv"], prepared["wo_t"], prepared["bo"])

    return out_flat.reshape(N, Lq, E)


def self_attention_reference(values, keys, query, params, heads):
    """Pure-JAX reference matching the PyTorch forward (mask=None path)."""
    N, Lv, E = values.shape
    Lk = keys.shape[1]
    Lq = query.shape[1]
    D = E // heads
    v = values.reshape(N, Lv, heads, D) @ params["wv"].T
    k = keys.reshape(N, Lk, heads, D) @ params["wk"].T
    q = query.reshape(N, Lq, heads, D) @ params["wq"].T
    scores = jnp.einsum("nqhd,nkhd->nhqk", q, k) / (E ** 0.5)
    attn = jax.nn.softmax(scores, axis=3)
    out = jnp.einsum("nhql,nlhd->nqhd", attn, v).reshape(N, Lq, E)
    return out @ params["wo"].T + params["bo"]


if __name__ == "__main__":
    # Small, module-consistent shapes.
    N, L, E, H = 2, 8, 32, 4          # batch, seq, embeddings_size, heads
    D = E // H

    key = jax.random.PRNGKey(0)
    k_v, k_k, k_q, k_wv, k_wk, k_wq, k_wo, k_bo = jax.random.split(key, 8)

    values = jax.random.normal(k_v, (N, L, E), dtype=jnp.float32)
    keys_in = jax.random.normal(k_k, (N, L, E), dtype=jnp.float32)
    query = jax.random.normal(k_q, (N, L, E), dtype=jnp.float32)

    # Deterministic parameter init (PyTorch nn.Linear weight shape = (out, in)).
    params = {
        "wv": jax.random.normal(k_wv, (D, D), dtype=jnp.float32) * 0.1,
        "wk": jax.random.normal(k_wk, (D, D), dtype=jnp.float32) * 0.1,
        "wq": jax.random.normal(k_wq, (D, D), dtype=jnp.float32) * 0.1,
        "wo": jax.random.normal(k_wo, (E, E), dtype=jnp.float32) * 0.1,
        "bo": jax.random.normal(k_bo, (E,), dtype=jnp.float32) * 0.1,
    }

    # One-time weight preparation (hoisted out of the per-call path) and a
    # jitted forward so nothing un-hidden executes per call.
    prepared = prepare_params(params, heads=H)
    fwd = jax.jit(functools.partial(self_attention_pallas, heads=H))

    out = jax.block_until_ready(fwd(values, keys_in, query, prepared))

    ref = jax.block_until_ready(
        self_attention_reference(values, keys_in, query, params, H))
    # Exact softmax reciprocal + f32 MXU accumulation everywhere -> tighter
    # tolerance than the previous (approx-reciprocal) revision.
    np.testing.assert_allclose(np.asarray(out), np.asarray(ref), rtol=1e-3, atol=1e-3)

    print("KERNEL_OK")
</pallas_src>

<mosaic_0001>
module attributes {stable_mosaic.version = 11 : i64} {
  func.func @_self_attention_kernel(%arg0: i32, %arg1: memref<2x8x32xf32, #tpu.memory_space<vmem>>, %arg2: memref<2x8x32xf32, #tpu.memory_space<vmem>>, %arg3: memref<2x8x32xf32, #tpu.memory_space<vmem>>, %arg4: memref<32x96xf32, #tpu.memory_space<vmem>>, %arg5: memref<32x32xf32, #tpu.memory_space<vmem>>, %arg6: memref<1x32xf32, #tpu.memory_space<vmem>>, %arg7: memref<16x32xf32, #tpu.memory_space<vmem>>) attributes {dimension_semantics = [#tpu.dimension_semantics<parallel>], iteration_bounds = array<i64: 1>, scalar_prefetch = 0 : i64, scratch_operands = 0 : i64, tpu.core_type = #tpu.core_type<tc>, window_params = [{transform_indices = @transform_0, window_bounds = array<i64: 2, 8, 32>}, {transform_indices = @transform_1, window_bounds = array<i64: 2, 8, 32>}, {transform_indices = @transform_2, window_bounds = array<i64: 2, 8, 32>}, {pipeline_mode = #tpu.pipeline_mode<synchronous>, transform_indices = @transform_3, window_bounds = array<i64: 32, 96>}, {pipeline_mode = #tpu.pipeline_mode<synchronous>, transform_indices = @transform_4, window_bounds = array<i64: 32, 32>}, {pipeline_mode = #tpu.pipeline_mode<synchronous>, transform_indices = @transform_5, window_bounds = array<i64: 1, 32>}, {transform_indices = @transform_6, window_bounds = array<i64: 16, 32>}]} {
    %c0 = arith.constant 0 : index
    %c0_0 = arith.constant 0 : index
    %c0_1 = arith.constant 0 : index
    %0 = vector.load %arg1[%c0, %c0_0, %c0_1] : memref<2x8x32xf32, #tpu.memory_space<vmem>>, vector<2x8x32xf32>
    %c0_2 = arith.constant 0 : index
    %c0_3 = arith.constant 0 : index
    %c0_4 = arith.constant 0 : index
    %1 = vector.load %arg2[%c0_2, %c0_3, %c0_4] : memref<2x8x32xf32, #tpu.memory_space<vmem>>, vector<2x8x32xf32>
    %c0_5 = arith.constant 0 : index
    %c0_6 = arith.constant 0 : index
    %c0_7 = arith.constant 0 : index
    %2 = vector.load %arg3[%c0_5, %c0_6, %c0_7] : memref<2x8x32xf32, #tpu.memory_space<vmem>>, vector<2x8x32xf32>
    %3 = tpu.concatenate %0, %1, %2 in 1 : vector<2x8x32xf32>, vector<2x8x32xf32>, vector<2x8x32xf32> -> vector<2x24x32xf32>
    %4 = vector.shape_cast %3 : vector<2x24x32xf32> to vector<48x32xf32>
    %c0_8 = arith.constant 0 : index
    %c0_9 = arith.constant 0 : index
    %5 = vector.load %arg4[%c0_8, %c0_9] : memref<32x96xf32, #tpu.memory_space<vmem>>, vector<32x96xf32>
    %cst = arith.constant dense<0.000000e+00> : vector<48x96xf32>
    %6 = tpu.matmul %4, %5, %cst {dimension_numbers = #tpu.dot_dimension_numbers<[1], [0], [0], [1], [0, 0, 1, 1], [], []>} : vector<48x32xf32>, vector<32x96xf32>, vector<48x96xf32> -> vector<48x96xf32>
    %7 = vector.shape_cast %6 : vector<48x96xf32> to vector<2x24x96xf32>
    %8 = vector.extract_strided_slice %7 {offsets = [0, 0, 0], sizes = [2, 8, 8], strides = [1, 1, 1]} : vector<2x24x96xf32> to vector<2x8x8xf32>
    %9 = vector.extract_strided_slice %7 {offsets = [0, 8, 32], sizes = [2, 8, 8], strides = [1, 1, 1]} : vector<2x24x96xf32> to vector<2x8x8xf32>
    %10 = vector.extract_strided_slice %7 {offsets = [0, 16, 64], sizes = [2, 8, 8], strides = [1, 1, 1]} : vector<2x24x96xf32> to vector<2x8x8xf32>
    "tpu.trace_start"() <{level = 10 : i32, message = "bqd,bkd->bqk"}> : () -> ()
    %cst_10 = arith.constant dense<0.000000e+00> : vector<2x8x8xf32>
    %11 = tpu.matmul %8, %9, %cst_10 {dimension_numbers = #tpu.dot_dimension_numbers<[2], [2], [1], [1], [0, 0, 0, 1, 1, 1], [0], [0]>} : vector<2x8x8xf32>, vector<2x8x8xf32>, vector<2x8x8xf32> -> vector<2x8x8xf32>
    "tpu.trace_stop"() : () -> ()
    %cst_11 = arith.constant dense<0xFF800000> : vector<2x8xf32>
    %12 = vector.multi_reduction <maximumf>, %11, %cst_11 [2] : vector<2x8x8xf32> to vector<2x8xf32>
    %13 = vector.shape_cast %12 : vector<2x8xf32> to vector<2x8x1xf32>
    %14 = vector.broadcast %13 : vector<2x8x1xf32> to vector<2x8x8xf32>
    %15 = arith.subf %11, %14 : vector<2x8x8xf32>
    %16 = math.exp %15 : vector<2x8x8xf32>
    %cst_12 = arith.constant dense<0.000000e+00> : vector<2x8xf32>
    %17 = vector.multi_reduction <add>, %16, %cst_12 [2] : vector<2x8x8xf32> to vector<2x8xf32>
    %18 = vector.shape_cast %17 : vector<2x8xf32> to vector<2x8x1xf32>
    %19 = tpu.reciprocal %18 : vector<2x8x1xf32> -> vector<2x8x1xf32>
    %20 = vector.broadcast %19 : vector<2x8x1xf32> to vector<2x8x8xf32>
    %21 = arith.mulf %16, %20 : vector<2x8x8xf32>
    "tpu.trace_start"() <{level = 10 : i32, message = "bqk,bkd->bqd"}> : () -> ()
    %cst_13 = arith.constant dense<0.000000e+00> : vector<2x8x8xf32>
    %22 = tpu.matmul %21, %10, %cst_13 {dimension_numbers = #tpu.dot_dimension_numbers<[2], [1], [1], [2], [0, 0, 0, 1, 1, 2], [0], [0]>} : vector<2x8x8xf32>, vector<2x8x8xf32>, vector<2x8x8xf32> -> vector<2x8x8xf32>
    "tpu.trace_stop"() : () -> ()
    %23 = vector.shape_cast %22 : vector<2x8x8xf32> to vector<16x8xf32>
    %24 = vector.extract_strided_slice %7 {offsets = [0, 0, 8], sizes = [2, 8, 8], strides = [1, 1, 1]} : vector<2x24x96xf32> to vector<2x8x8xf32>
    %25 = vector.extract_strided_slice %7 {offsets = [0, 8, 40], sizes = [2, 8, 8], strides = [1, 1, 1]} : vector<2x24x96xf32> to vector<2x8x8xf32>
    %26 = vector.extract_strided_slice %7 {offsets = [0, 16, 72], sizes = [2, 8, 8], strides = [1, 1, 1]} : vector<2x24x96xf32> to vector<2x8x8xf32>
    "tpu.trace_start"() <{level = 10 : i32, message = "bqd,bkd->bqk"}> : () -> ()
    %cst_14 = arith.constant dense<0.000000e+00> : vector<2x8x8xf32>
    %27 = tpu.matmul %24, %25, %cst_14 {dimension_numbers = #tpu.dot_dimension_numbers<[2], [2], [1], [1], [0, 0, 0, 1, 1, 1], [0], [0]>} : vector<2x8x8xf32>, vector<2x8x8xf32>, vector<2x8x8xf32> -> vector<2x8x8xf32>
    "tpu.trace_stop"() : () -> ()
    %cst_15 = arith.constant dense<0xFF800000> : vector<2x8xf32>
    %28 = vector.multi_reduction <maximumf>, %27, %cst_15 [2] : vector<2x8x8xf32> to vector<2x8xf32>
    %29 = vector.shape_cast %28 : vector<2x8xf32> to vector<2x8x1xf32>
    %30 = vector.broadcast %29 : vector<2x8x1xf32> to vector<2x8x8xf32>
    %31 = arith.subf %27, %30 : vector<2x8x8xf32>
    %32 = math.exp %31 : vector<2x8x8xf32>
    %cst_16 = arith.constant dense<0.000000e+00> : vector<2x8xf32>
    %33 = vector.multi_reduction <add>, %32, %cst_16 [2] : vector<2x8x8xf32> to vector<2x8xf32>
    %34 = vector.shape_cast %33 : vector<2x8xf32> to vector<2x8x1xf32>
    %35 = tpu.reciprocal %34 : vector<2x8x1xf32> -> vector<2x8x1xf32>
    %36 = vector.broadcast %35 : vector<2x8x1xf32> to vector<2x8x8xf32>
    %37 = arith.mulf %32, %36 : vector<2x8x8xf32>
    "tpu.trace_start"() <{level = 10 : i32, message = "bqk,bkd->bqd"}> : () -> ()
    %cst_17 = arith.constant dense<0.000000e+00> : vector<2x8x8xf32>
    %38 = tpu.matmul %37, %26, %cst_17 {dimension_numbers = #tpu.dot_dimension_numbers<[2], [1], [1], [2], [0, 0, 0, 1, 1, 2], [0], [0]>} : vector<2x8x8xf32>, vector<2x8x8xf32>, vector<2x8x8xf32> -> vector<2x8x8xf32>
    "tpu.trace_stop"() : () -> ()
    %39 = vector.shape_cast %38 : vector<2x8x8xf32> to vector<16x8xf32>
    %40 = vector.extract_strided_slice %7 {offsets = [0, 0, 16], sizes = [2, 8, 8], strides = [1, 1, 1]} : vector<2x24x96xf32> to vector<2x8x8xf32>
    %41 = vector.extract_strided_slice %7 {offsets = [0, 8, 48], sizes = [2, 8, 8], strides = [1, 1, 1]} : vector<2x24x96xf32> to vector<2x8x8xf32>
    %42 = vector.extract_strided_slice %7 {offsets = [0, 16, 80], sizes = [2, 8, 8], strides = [1, 1, 1]} : vector<2x24x96xf32> to vector<2x8x8xf32>
    "tpu.trace_start"() <{level = 10 : i32, message = "bqd,bkd->bqk"}> : () -> ()
    %cst_18 = arith.constant dense<0.000000e+00> : vector<2x8x8xf32>
    %43 = tpu.matmul %40, %41, %cst_18 {dimension_numbers = #tpu.dot_dimension_numbers<[2], [2], [1], [1], [0, 0, 0, 1, 1, 1], [0], [0]>} : vector<2x8x8xf32>, vector<2x8x8xf32>, vector<2x8x8xf32> -> vector<2x8x8xf32>
    "tpu.trace_stop"() : () -> ()
    %cst_19 = arith.constant dense<0xFF800000> : vector<2x8xf32>
    %44 = vector.multi_reduction <maximumf>, %43, %cst_19 [2] : vector<2x8x8xf32> to vector<2x8xf32>
    %45 = vector.shape_cast %44 : vector<2x8xf32> to vector<2x8x1xf32>
    %46 = vector.broadcast %45 : vector<2x8x1xf32> to vector<2x8x8xf32>
    %47 = arith.subf %43, %46 : vector<2x8x8xf32>
    %48 = math.exp %47 : vector<2x8x8xf32>
    %cst_20 = arith.constant dense<0.000000e+00> : vector<2x8xf32>
    %49 = vector.multi_reduction <add>, %48, %cst_20 [2] : vector<2x8x8xf32> to vector<2x8xf32>
    %50 = vector.shape_cast %49 : vector<2x8xf32> to vector<2x8x1xf32>
    %51 = tpu.reciprocal %50 : vector<2x8x1xf32> -> vector<2x8x1xf32>
    %52 = vector.broadcast %51 : vector<2x8x1xf32> to vector<2x8x8xf32>
    %53 = arith.mulf %48, %52 : vector<2x8x8xf32>
    "tpu.trace_start"() <{level = 10 : i32, message = "bqk,bkd->bqd"}> : () -> ()
    %cst_21 = arith.constant dense<0.000000e+00> : vector<2x8x8xf32>
    %54 = tpu.matmul %53, %42, %cst_21 {dimension_numbers = #tpu.dot_dimension_numbers<[2], [1], [1], [2], [0, 0, 0, 1, 1, 2], [0], [0]>} : vector<2x8x8xf32>, vector<2x8x8xf32>, vector<2x8x8xf32> -> vector<2x8x8xf32>
    "tpu.trace_stop"() : () -> ()
    %55 = vector.shape_cast %54 : vector<2x8x8xf32> to vector<16x8xf32>
    %56 = vector.extract_strided_slice %7 {offsets = [0, 0, 24], sizes = [2, 8, 8], strides = [1, 1, 1]} : vector<2x24x96xf32> to vector<2x8x8xf32>
    %57 = vector.extract_strided_slice %7 {offsets = [0, 8, 56], sizes = [2, 8, 8], strides = [1, 1, 1]} : vector<2x24x96xf32> to vector<2x8x8xf32>
    %58 = vector.extract_strided_slice %7 {offsets = [0, 16, 88], sizes = [2, 8, 8], strides = [1, 1, 1]} : vector<2x24x96xf32> to vector<2x8x8xf32>
    "tpu.trace_start"() <{level = 10 : i32, message = "bqd,bkd->bqk"}> : () -> ()
    %cst_22 = arith.constant dense<0.000000e+00> : vector<2x8x8xf32>
    %59 = tpu.matmul %56, %57, %cst_22 {dimension_numbers = #tpu.dot_dimension_numbers<[2], [2], [1], [1], [0, 0, 0, 1, 1, 1], [0], [0]>} : vector<2x8x8xf32>, vector<2x8x8xf32>, vector<2x8x8xf32> -> vector<2x8x8xf32>
    "tpu.trace_stop"() : () -> ()
    %cst_23 = arith.constant dense<0xFF800000> : vector<2x8xf32>
    %60 = vector.multi_reduction <maximumf>, %59, %cst_23 [2] : vector<2x8x8xf32> to vector<2x8xf32>
    %61 = vector.shape_cast %60 : vector<2x8xf32> to vector<2x8x1xf32>
    %62 = vector.broadcast %61 : vector<2x8x1xf32> to vector<2x8x8xf32>
    %63 = arith.subf %59, %62 : vector<2x8x8xf32>
    %64 = math.exp %63 : vector<2x8x8xf32>
    %cst_24 = arith.constant dense<0.000000e+00> : vector<2x8xf32>
    %65 = vector.multi_reduction <add>, %64, %cst_24 [2] : vector<2x8x8xf32> to vector<2x8xf32>
    %66 = vector.shape_cast %65 : vector<2x8xf32> to vector<2x8x1xf32>
    %67 = tpu.reciprocal %66 : vector<2x8x1xf32> -> vector<2x8x1xf32>
    %68 = vector.broadcast %67 : vector<2x8x1xf32> to vector<2x8x8xf32>
    %69 = arith.mulf %64, %68 : vector<2x8x8xf32>
    "tpu.trace_start"() <{level = 10 : i32, message = "bqk,bkd->bqd"}> : () -> ()
    %cst_25 = arith.constant dense<0.000000e+00> : vector<2x8x8xf32>
    %70 = tpu.matmul %69, %58, %cst_25 {dimension_numbers = #tpu.dot_dimension_numbers<[2], [1], [1], [2], [0, 0, 0, 1, 1, 2], [0], [0]>} : vector<2x8x8xf32>, vector<2x8x8xf32>, vector<2x8x8xf32> -> vector<2x8x8xf32>
    "tpu.trace_stop"() : () -> ()
    %71 = vector.shape_cast %70 : vector<2x8x8xf32> to vector<16x8xf32>
    %72 = tpu.concatenate %23, %39, %55, %71 in 1 : vector<16x8xf32>, vector<16x8xf32>, vector<16x8xf32>, vector<16x8xf32> -> vector<16x32xf32>
    %c0_26 = arith.constant 0 : index
    %c0_27 = arith.constant 0 : index
    %73 = vector.load %arg5[%c0_26, %c0_27] : memref<32x32xf32, #tpu.memory_space<vmem>>, vector<32x32xf32>
    %cst_28 = arith.constant dense<0.000000e+00> : vector<16x32xf32>
    %74 = tpu.matmul %72, %73, %cst_28 {dimension_numbers = #tpu.dot_dimension_numbers<[1], [0], [0], [1], [0, 0, 1, 1], [], []>} : vector<16x32xf32>, vector<32x32xf32>, vector<16x32xf32> -> vector<16x32xf32>
    %c0_29 = arith.constant 0 : index
    %c0_30 = arith.constant 0 : index
    %75 = vector.load %arg6[%c0_29, %c0_30] : memref<1x32xf32, #tpu.memory_space<vmem>>, vector<1x32xf32>
    %76 = vector.broadcast %75 : vector<1x32xf32> to vector<16x32xf32>
    %77 = arith.addf %74, %76 : vector<16x32xf32>
    %c0_31 = arith.constant 0 : index
    %c0_32 = arith.constant 0 : index
    %78 = vector.load %arg7[%c0_31, %c0_32] : memref<16x32xf32, #tpu.memory_space<vmem>>, vector<16x32xf32>
    tpu.vector_store %arg7[%c0_31, %c0_32], %77 {strides = array<i32>} : memref<16x32xf32, #tpu.memory_space<vmem>>, vector<16x32xf32>,
    return
  }
  func.func @transform_0(%arg0: i32) -> (i32, i32, i32) {
    %c0_i32 = arith.constant 0 : i32
    %c0_i32_0 = arith.constant 0 : i32
    %c0_i32_1 = arith.constant 0 : i32
    return %arg0, %c0_i32, %c0_i32_0 : i32, i32, i32
  }
  func.func @transform_1(%arg0: i32) -> (i32, i32, i32) {
    %c0_i32 = arith.constant 0 : i32
    %c0_i32_0 = arith.constant 0 : i32
    %c0_i32_1 = arith.constant 0 : i32
    return %arg0, %c0_i32, %c0_i32_0 : i32, i32, i32
  }
  func.func @transform_2(%arg0: i32) -> (i32, i32, i32) {
    %c0_i32 = arith.constant 0 : i32
    %c0_i32_0 = arith.constant 0 : i32
    %c0_i32_1 = arith.constant 0 : i32
    return %arg0, %c0_i32, %c0_i32_0 : i32, i32, i32
  }
  func.func @transform_3(%arg0: i32) -> (i32, i32) {
    %c0_i32 = arith.constant 0 : i32
    %c0_i32_0 = arith.constant 0 : i32
    %c0_i32_1 = arith.constant 0 : i32
    return %c0_i32, %c0_i32_0 : i32, i32
  }
  func.func @transform_4(%arg0: i32) -> (i32, i32) {
    %c0_i32 = arith.constant 0 : i32
    %c0_i32_0 = arith.constant 0 : i32
    %c0_i32_1 = arith.constant 0 : i32
    return %c0_i32, %c0_i32_0 : i32, i32
  }
  func.func @transform_5(%arg0: i32) -> (i32, i32) {
    %c0_i32 = arith.constant 0 : i32
    %c0_i32_0 = arith.constant 0 : i32
    %c0_i32_1 = arith.constant 0 : i32
    return %c0_i32, %c0_i32_0 : i32, i32
  }
  func.func @transform_6(%arg0: i32) -> (i32, i32) {
    %c0_i32 = arith.constant 0 : i32
    %c0_i32_0 = arith.constant 0 : i32
    return %arg0, %c0_i32 : i32, i32
  }
}

</mosaic_0001>

<llo_original>
// kernel: self_attention_pallas.1
$region0: #{self_attention_pallas.1}
  #allocation0 [shape = 'u32[]', space=smem, size = 0x4, offset = 0x4, fixed_abs, tag = 'smem constant byte address 0x4 - core index']
  #allocation1 [shape = 'u32[144,128]{1,0:T(1,128)}', space=vmem, size = 0x12000, scoped, tag = 'internal scratch']
  %s0 = inlined_call_operand.hbm [shape: f32[2,8,32], index: 0, kind: input, shape index: {}]
  %s1 = inlined_call_operand.hbm [shape: f32[2,8,32], index: 1, kind: input, shape index: {}]
  %s2 = inlined_call_operand.hbm [shape: f32[2,8,32], index: 2, kind: input, shape index: {}]
  %s3 = inlined_call_operand.hbm [shape: f32[32,96], index: 3, kind: input, shape index: {}]
  %s4 = inlined_call_operand.hbm [shape: f32[32,32], index: 4, kind: input, shape index: {}]
  %s5 = inlined_call_operand.vmem [shape: f32[1,32], index: 5, kind: input, shape index: {}]
  %s6 = inlined_call_operand.hbm [shape: f32[16,32], index: 6, kind: output, shape index: {}]
  %s7 = sld [smem:[#allocation0]]
  $region54: #{self_attention_pallas.1} parent=0
    _
  %s9 = ssub.s32 1, %s7
  %s10 = scalar_select 0, %s9, %s7
  $region1: #{self_attention_pallas.1} parent=0
    #allocation2 [shape = 'u8[8192]{0}', space=vmem, size = 0x2000, scoped, tag = 'input window, operand 0, single buffered']
    #allocation3 [shape = 's32[1]{0}', space=sflag, size = 0x4, scoped, tag = 'scoped memory for self_attention_pallas.1']
    #allocation4 [shape = 's32[1]{0}', space=sflag, size = 0x4, scoped, tag = 'scoped memory for self_attention_pallas.1']
    #allocation5 [shape = 'u8[8192]{0}', space=vmem, size = 0x2000, scoped, tag = 'input window, operand 1, single buffered']
    #allocation6 [shape = 's32[1]{0}', space=sflag, size = 0x4, scoped, tag = 'scoped memory for self_attention_pallas.1']
    #allocation7 [shape = 'u8[8192]{0}', space=vmem, size = 0x2000, scoped, tag = 'input window, operand 2, single buffered']
    #allocation8 [shape = 'u8[16384]{0}', space=vmem, size = 0x4000, scoped, tag = 'input window, operand 3, single buffered']
    #allocation9 [shape = 's32[1]{0}', space=sflag, size = 0x4, scoped, tag = 'scoped memory for self_attention_pallas.1']
    #allocation10 [shape = 'u8[16384]{0}', space=vmem, size = 0x4000, scoped, tag = 'input window, operand 4, single buffered']
    #allocation11 [shape = 'u8[8192]{0}', space=vmem, size = 0x2000, scoped, tag = 'output window, operand 0, single buffered']
    %11 = vsyncpa [#allocation3], 0
    %12 = vsyncpa [#allocation6], 0
    %13 = vsyncpa [#allocation9], 0
    %14 = vsyncpa [#allocation4], 0
    // Predicated region
    $region2: #{self_attention_pallas.1} parent=1 // pred_check
      _
    $region3: #{self_attention_pallas.1} parent=1 // pred_check_branch
      %16 = sbr.rel (0) target = $region5
    $region4: #{self_attention_pallas.1} parent=1 // pred_region
      %s18 = ssub.s32 256, 256
      %19 = vsyncadd [#allocation3], %s18
      %s20 = sshll.u32 [#allocation2], 4
      %s21 = int_to_ptr.vmem [resolvable:$true] %s20
      %26 = dma.hbm_to_vmem [thread:$0]  %s0, 256, %s21, [#allocation3], 128, 128, 8
    $region5: #{self_attention_pallas.1} parent=1 // pred_fallthru
      _
    // Predicated region
    $region6: #{self_attention_pallas.1} parent=1 // pred_check
      _
    $region7: #{self_attention_pallas.1} parent=1 // pred_check_branch
      %28 = sbr.rel (0) target = $region9
    $region8: #{self_attention_pallas.1} parent=1 // pred_region
      %s30 = ssub.s32 256, 256
      %31 = vsyncadd [#allocation6], %s30
      %s32 = sshll.u32 [#allocation5], 4
      %s33 = int_to_ptr.vmem [resolvable:$true] %s32
      %38 = dma.hbm_to_vmem [thread:$0]  %s1, 256, %s33, [#allocation6], 128, 128, 8
    $region9: #{self_attention_pallas.1} parent=1 // pred_fallthru
      _
    // Predicated region
    $region10: #{self_attention_pallas.1} parent=1 // pred_check
      _
    $region11: #{self_attention_pallas.1} parent=1 // pred_check_branch
      %40 = sbr.rel (0) target = $region13
    $region12: #{self_attention_pallas.1} parent=1 // pred_region
      %s42 = ssub.s32 256, 256
      %43 = vsyncadd [#allocation6], %s42
      %s44 = sshll.u32 [#allocation7], 4
      %s45 = int_to_ptr.vmem [resolvable:$true] %s44
      %50 = dma.hbm_to_vmem [thread:$0]  %s2, 256, %s45, [#allocation6], 128, 128, 8
    $region13: #{self_attention_pallas.1} parent=1 // pred_fallthru
      _
    // Predicated region
    $region14: #{self_attention_pallas.1} parent=1 // pred_check
      _
    $region15: #{self_attention_pallas.1} parent=1 // pred_check_branch
      %52 = sbr.rel (0) target = $region17
    $region16: #{self_attention_pallas.1} parent=1 // pred_region
      %s54 = ssub.s32 512, 512
      %55 = vsyncadd [#allocation9], %s54
      %s56 = sshll.u32 [#allocation8], 4
      %s57 = int_to_ptr.vmem [resolvable:$true] %s56
      %62 = dma.hbm_to_vmem [thread:$0]  %s3, 512, %s57, [#allocation9], 128, 128, 8
    $region17: #{self_attention_pallas.1} parent=1 // pred_fallthru
      _
    // Predicated region
    $region18: #{self_attention_pallas.1} parent=1 // pred_check
      _
    $region19: #{self_attention_pallas.1} parent=1 // pred_check_branch
      %64 = sbr.rel (0) target = $region21
    $region20: #{self_attention_pallas.1} parent=1 // pred_region
      %s66 = ssub.s32 512, 512
      %67 = vsyncadd [#allocation9], %s66
      %s68 = sshll.u32 [#allocation10], 4
      %s69 = int_to_ptr.vmem [resolvable:$true] %s68
      %74 = dma.hbm_to_vmem [thread:$0]  %s4, 512, %s69, [#allocation9], 128, 128, 8
    $region21: #{self_attention_pallas.1} parent=1 // pred_fallthru
      _
    // Predicated region
    $region22: #{self_attention_pallas.1} parent=1 // pred_check
      _
    $region23: #{self_attention_pallas.1} parent=1 // pred_check_branch
      %76 = sbr.rel (0) target = $region25
    $region24: #{self_attention_pallas.1} parent=1 // pred_region
      _
    $region25: #{self_attention_pallas.1} parent=1 // pred_fallthru
      _
    // Predicated region
    $region26: #{self_attention_pallas.1} parent=1 // pred_check
      _
    $region27: #{self_attention_pallas.1} parent=1 // pred_check_branch
      %78 = sbr.rel (0) target = $region29
    $region28: #{self_attention_pallas.1} parent=1 // pred_region
      %79 = dma.done [#allocation3], 256
    $region29: #{self_attention_pallas.1} parent=1 // pred_fallthru
      _
    // Predicated region
    $region30: #{self_attention_pallas.1} parent=1 // pred_check
      _
    $region31: #{self_attention_pallas.1} parent=1 // pred_check_branch
      %81 = sbr.rel (0) target = $region33
    $region32: #{self_attention_pallas.1} parent=1 // pred_region
      %82 = dma.done [#allocation6], 256
    $region33: #{self_attention_pallas.1} parent=1 // pred_fallthru
      _
    // Predicated region
    $region34: #{self_attention_pallas.1} parent=1 // pred_check
      _
    $region35: #{self_attention_pallas.1} parent=1 // pred_check_branch
      %84 = sbr.rel (0) target = $region37
    $region36: #{self_attention_pallas.1} parent=1 // pred_region
      %85 = dma.done [#allocation6], 256
    $region37: #{self_attention_pallas.1} parent=1 // pred_fallthru
      _
    // Predicated region
    $region38: #{self_attention_pallas.1} parent=1 // pred_check
      _
    $region39: #{self_attention_pallas.1} parent=1 // pred_check_branch
      %87 = sbr.rel (0) target = $region41
    $region40: #{self_attention_pallas.1} parent=1 // pred_region
      %88 = dma.done [#allocation9], 512
    $region41: #{self_attention_pallas.1} parent=1 // pred_fallthru
      _
    // Predicated region
    $region42: #{self_attention_pallas.1} parent=1 // pred_check
      _
    $region43: #{self_attention_pallas.1} parent=1 // pred_check_branch
      %90 = sbr.rel (0) target = $region45
    $region44: #{self_attention_pallas.1} parent=1 // pred_region
      %91 = dma.done [#allocation9], 512
    $region45: #{self_attention_pallas.1} parent=1 // pred_fallthru
      _
    %v92 = vld [vmem:[#allocation2] sm:$0xff]
    %v93 = vld [vmem:[#allocation2 + $0x8] sm:$0xff]
    %v94 = vld [vmem:[#allocation5] sm:$0xff]
    %v95 = vld [vmem:[#allocation5 + $0x8] sm:$0xff]
    %v96 = vld [vmem:[#allocation7] sm:$0xff]
    %v97 = vld [vmem:[#allocation7 + $0x8] sm:$0xff]
    %v98 = vld [vmem:[#allocation8] sm:$0xff]
    %v99 = vld [vmem:[#allocation8 + $0x8] sm:$0xff]
    %v100 = vld [vmem:[#allocation8 + $0x10] sm:$0xff]
    %v101 = vld [vmem:[#allocation8 + $0x18] sm:$0xff]
    %vm102 = vcmask 261120
    %v104 = vsel %vm102, %v92, 0
    %v107 = vsel %vm102, %v94, 0
    %v110 = vsel %vm102, %v96, 0
    %v113 = vsel %vm102, %v93, 0
    %v116 = vsel %vm102, %v95, 0
    %v119 = vsel %vm102, %v97, 0
    %121 = vmatprep.subr.mxu0 0.0
    %122 = vmatpush1.msra.mxu0 %v98
    %123 = vmatprep.subr.mxu0 0.0
    %124 = vmatpush1.msra.mxu0 %v99
    %125 = vmatprep.subr.mxu0 0.0
    %126 = vmatpush1.msra.mxu0 %v100
    %127 = vmatprep.subr.mxu0 0.0
    %128 = vmatpush1.msra.mxu0 %v101
    %129 = vmatprep.subr.mxu0 0.0
    %130 = vmatpush1.msra.mxu0 0.0
    %131 = vmatprep.subr.mxu0 0.0
    %132 = vmatpush1.msra.mxu0 0.0
    %133 = vmatprep.subr.mxu0 0.0
    %134 = vmatpush1.msra.mxu0 0.0
    %135 = vmatprep.subr.mxu0 0.0
    %136 = vmatpush1.msra.mxu0 0.0
    %137 = vmatprep.subr.mxu0 0.0
    %138 = vmatpush1.msra.mxu0 0.0
    %139 = vmatprep.subr.mxu0 0.0
    %140 = vmatpush1.msra.mxu0 0.0
    %141 = vmatprep.subr.mxu0 0.0
    %142 = vmatpush1.msra.mxu0 0.0
    %143 = vmatprep.subr.mxu0 0.0
    %144 = vmatpush1.msra.mxu0 0.0
    %145 = vmatprep.subr.mxu0 0.0
    %146 = vmatpush1.msra.mxu0 0.0
    %147 = vmatprep.subr.mxu0 0.0
    %148 = vmatpush1.msra.mxu0 0.0
    %149 = vmatprep.subr.mxu0 0.0
    %150 = vmatpush1.msra.mxu0 0.0
    %151 = vmatprep.subr.mxu0 0.0
    %152 = vmatpush1.msra.mxu0 0.0
    %153 = vmatprep.subr.mxu0 0.0
    %154 = vmatpush1.msra.mxu0 0.0
    %155 = vmatprep.subr.mxu0 0.0
    %156 = vmatpush1.msra.mxu0 0.0
    %157 = vmatprep.subr.mxu0 0.0
    %158 = vmatpush1.msra.mxu0 0.0
    %159 = vmatprep.subr.mxu0 0.0
    %160 = vmatpush1.msra.mxu0 0.0
    %161 = vmatprep.subr.mxu0 0.0
    %162 = vmatpush1.msra.mxu0 0.0
    %163 = vmatprep.subr.mxu0 0.0
    %164 = vmatpush1.msra.mxu0 0.0
    %165 = vmatprep.subr.mxu0 0.0
    %166 = vmatpush1.msra.mxu0 0.0
    %167 = vmatprep.subr.mxu0 0.0
    %168 = vmatpush1.msra.mxu0 0.0
    %169 = vmatprep.subr.mxu0 0.0
    %170 = vmatpush1.msra.mxu0 0.0
    %171 = vmatprep.subr.mxu0 0.0
    %172 = vmatpush1.msra.mxu0 0.0
    %173 = vmatprep.subr.mxu0 0.0
    %174 = vmatpush1.msra.mxu0 0.0
    %175 = vmatprep.subr.mxu0 0.0
    %176 = vmatpush1.msra.mxu0 0.0
    %177 = vmatprep.subr.mxu0 0.0
    %178 = vmatpush1.msra.mxu0 0.0
    %179 = vmatprep.subr.mxu0 0.0
    %180 = vmatpush1.msra.mxu0 0.0
    %181 = vmatprep.subr.mxu0 0.0
    %182 = vmatpush1.msra.mxu0 0.0
    %183 = vmatprep.subr.mxu0 0.0
    %184 = vmatpush1.msra.mxu0 0.0
    %185 = vmatprep.mubr.f32.mxu0 0.0
    %186 = vmatmul.mubr.f32.gmra.mrb[0].mxu0 %v104
    %v187 = vpop.f32.mrb[0].mxu0
    %v188 = vadd.f32 0.0, %v187
    %v189 = vpop.f32.mrb[0].mxu0
    %190 = vmatprep.mubr.f32.mxu0 0.0
    %191 = vmatmul.mubr.f32.gmra.mrb[0].mxu0 %v107
    %v192 = vpop.f32.mrb[0].mxu0
    %v193 = vadd.f32 0.0, %v192
    %v194 = vpop.f32.mrb[0].mxu0
    %195 = vmatprep.mubr.f32.mxu0 0.0
    %196 = vmatmul.mubr.f32.gmra.mrb[0].mxu0 %v110
    %v197 = vpop.f32.mrb[0].mxu0
    %v198 = vadd.f32 0.0, %v197
    %v199 = vpop.f32.mrb[0].mxu0
    %200 = vmatprep.mubr.f32.mxu0 0.0
    %201 = vmatmul.mubr.f32.gmra.mrb[0].mxu0 %v113
    %v202 = vpop.f32.mrb[0].mxu0
    %v203 = vadd.f32 0.0, %v202
    %v204 = vpop.f32.mrb[0].mxu0
    %205 = vmatprep.mubr.f32.mxu0 0.0
    %206 = vmatmul.mubr.f32.gmra.mrb[0].mxu0 %v116
    %v207 = vpop.f32.mrb[0].mxu0
    %v208 = vadd.f32 0.0, %v207
    %v209 = vpop.f32.mrb[0].mxu0
    %210 = vmatprep.mubr.f32.mxu0 0.0
    %211 = vmatmul.mubr.f32.gmra.mrb[0].mxu0 %v119
    %v212 = vpop.f32.mrb[0].mxu0
    %v213 = vadd.f32 0.0, %v212
    %v214 = vpop.f32.mrb[0].mxu0
    %215 = vdwg.mxu0
    %217 = vrot.lane.b32.xlu0 %v193, 96
    %v218 = vpop.permute.xlu0 %217
    %vm219 = vcmask 64512
    %v221 = vsel %vm219, %v188, 0
    %v223 = vsel %vm219, %v218, 0
    %225 = vmatprep.subr.mxu0 0.0
    %226 = vmatpush1.xpose.msra.mxu0 %v223
    %227 = vmatprep.subr.mxu0 0.0
    %228 = vmatpush1.xpose.msra.mxu0 0.0
    %229 = vmatprep.subr.mxu0 0.0
    %230 = vmatpush1.xpose.msra.mxu0 0.0
    %231 = vmatprep.subr.mxu0 0.0
    %232 = vmatpush1.xpose.msra.mxu0 0.0
    %233 = vmatprep.subr.mxu0 0.0
    %234 = vmatpush1.xpose.msra.mxu0 0.0
    %235 = vmatprep.subr.mxu0 0.0
    %236 = vmatpush1.xpose.msra.mxu0 0.0
    %237 = vmatprep.subr.mxu0 0.0
    %238 = vmatpush1.xpose.msra.mxu0 0.0
    %239 = vmatprep.subr.mxu0 0.0
    %240 = vmatpush1.xpose.msra.mxu0 0.0
    %241 = vmatprep.subr.mxu0 0.0
    %242 = vmatpush1.xpose.msra.mxu0 0.0
    %243 = vmatprep.subr.mxu0 0.0
    %244 = vmatpush1.xpose.msra.mxu0 0.0
    %245 = vmatprep.subr.mxu0 0.0
    %246 = vmatpush1.xpose.msra.mxu0 0.0
    %247 = vmatprep.subr.mxu0 0.0
    %248 = vmatpush1.xpose.msra.mxu0 0.0
    %249 = vmatprep.subr.mxu0 0.0
    %250 = vmatpush1.xpose.msra.mxu0 0.0
    %251 = vmatprep.subr.mxu0 0.0
    %252 = vmatpush1.xpose.msra.mxu0 0.0
    %253 = vmatprep.subr.mxu0 0.0
    %254 = vmatpush1.xpose.msra.mxu0 0.0
    %255 = vmatprep.subr.mxu0 0.0
    %256 = vmatpush1.xpose.msra.mxu0 0.0
    %257 = vmatprep.subr.mxu0 0.0
    %258 = vmatpush1.xpose.msra.mxu0 0.0
    %259 = vmatprep.subr.mxu0 0.0
    %260 = vmatpush1.xpose.msra.mxu0 0.0
    %261 = vmatprep.subr.mxu0 0.0
    %262 = vmatpush1.xpose.msra.mxu0 0.0
    %263 = vmatprep.subr.mxu0 0.0
    %264 = vmatpush1.xpose.msra.mxu0 0.0
    %265 = vmatprep.subr.mxu0 0.0
    %266 = vmatpush1.xpose.msra.mxu0 0.0
    %267 = vmatprep.subr.mxu0 0.0
    %268 = vmatpush1.xpose.msra.mxu0 0.0
    %269 = vmatprep.subr.mxu0 0.0
    %270 = vmatpush1.xpose.msra.mxu0 0.0
    %271 = vmatprep.subr.mxu0 0.0
    %272 = vmatpush1.xpose.msra.mxu0 0.0
    %273 = vmatprep.subr.mxu0 0.0
    %274 = vmatpush1.xpose.msra.mxu0 0.0
    %275 = vmatprep.subr.mxu0 0.0
    %276 = vmatpush1.xpose.msra.mxu0 0.0
    %277 = vmatprep.subr.mxu0 0.0
    %278 = vmatpush1.xpose.msra.mxu0 0.0
    %279 = vmatprep.subr.mxu0 0.0
    %280 = vmatpush1.xpose.msra.mxu0 0.0
    %281 = vmatprep.subr.mxu0 0.0
    %282 = vmatpush1.xpose.msra.mxu0 0.0
    %283 = vmatprep.subr.mxu0 0.0
    %284 = vmatpush1.xpose.msra.mxu0 0.0
    %285 = vmatprep.subr.mxu0 0.0
    %286 = vmatpush1.xpose.msra.mxu0 0.0
    %287 = vmatprep.subr.mxu0 0.0
    %288 = vmatpush1.xpose.msra.mxu0 0.0
    %289 = vmatprep.mubr.f32.mxu0 0.0
    %290 = vmatmul.mubr.f32.gmra.mrb[0].mxu0 %v221
    %v291 = vpop.f32.mrb[0].mxu0
    %v292 = vadd.f32 0.0, %v291
    %v293 = vpop.f32.mrb[0].mxu0
    %294 = vdwg.mxu0
    %296 = vrot.lane.b32.xlu0 %v208, 96
    %v297 = vpop.permute.xlu0 %296
    %v299 = vsel %vm219, %v203, 0
    %v301 = vsel %vm219, %v297, 0
    %303 = vmatprep.subr.mxu0 0.0
    %304 = vmatpush1.xpose.msra.mxu0 %v301
    %305 = vmatprep.subr.mxu0 0.0
    %306 = vmatpush1.xpose.msra.mxu0 0.0
    %307 = vmatprep.subr.mxu0 0.0
    %308 = vmatpush1.xpose.msra.mxu0 0.0
    %309 = vmatprep.subr.mxu0 0.0
    %310 = vmatpush1.xpose.msra.mxu0 0.0
    %311 = vmatprep.subr.mxu0 0.0
    %312 = vmatpush1.xpose.msra.mxu0 0.0
    %313 = vmatprep.subr.mxu0 0.0
    %314 = vmatpush1.xpose.msra.mxu0 0.0
    %315 = vmatprep.subr.mxu0 0.0
    %316 = vmatpush1.xpose.msra.mxu0 0.0
    %317 = vmatprep.subr.mxu0 0.0
    %318 = vmatpush1.xpose.msra.mxu0 0.0
    %319 = vmatprep.subr.mxu0 0.0
    %320 = vmatpush1.xpose.msra.mxu0 0.0
    %321 = vmatprep.subr.mxu0 0.0
    %322 = vmatpush1.xpose.msra.mxu0 0.0
    %323 = vmatprep.subr.mxu0 0.0
    %324 = vmatpush1.xpose.msra.mxu0 0.0
    %325 = vmatprep.subr.mxu0 0.0
    %326 = vmatpush1.xpose.msra.mxu0 0.0
    %327 = vmatprep.subr.mxu0 0.0
    %328 = vmatpush1.xpose.msra.mxu0 0.0
    %329 = vmatprep.subr.mxu0 0.0
    %330 = vmatpush1.xpose.msra.mxu0 0.0
    %331 = vmatprep.subr.mxu0 0.0
    %332 = vmatpush1.xpose.msra.mxu0 0.0
    %333 = vmatprep.subr.mxu0 0.0
    %334 = vmatpush1.xpose.msra.mxu0 0.0
    %335 = vmatprep.subr.mxu0 0.0
    %336 = vmatpush1.xpose.msra.mxu0 0.0
    %337 = vmatprep.subr.mxu0 0.0
    %338 = vmatpush1.xpose.msra.mxu0 0.0
    %339 = vmatprep.subr.mxu0 0.0
    %340 = vmatpush1.xpose.msra.mxu0 0.0
    %341 = vmatprep.subr.mxu0 0.0
    %342 = vmatpush1.xpose.msra.mxu0 0.0
    %343 = vmatprep.subr.mxu0 0.0
    %344 = vmatpush1.xpose.msra.mxu0 0.0
    %345 = vmatprep.subr.mxu0 0.0
    %346 = vmatpush1.xpose.msra.mxu0 0.0
    %347 = vmatprep.subr.mxu0 0.0
    %348 = vmatpush1.xpose.msra.mxu0 0.0
    %349 = vmatprep.subr.mxu0 0.0
    %350 = vmatpush1.xpose.msra.mxu0 0.0
    %351 = vmatprep.subr.mxu0 0.0
    %352 = vmatpush1.xpose.msra.mxu0 0.0
    %353 = vmatprep.subr.mxu0 0.0
    %354 = vmatpush1.xpose.msra.mxu0 0.0
    %355 = vmatprep.subr.mxu0 0.0
    %356 = vmatpush1.xpose.msra.mxu0 0.0
    %357 = vmatprep.subr.mxu0 0.0
    %358 = vmatpush1.xpose.msra.mxu0 0.0
    %359 = vmatprep.subr.mxu0 0.0
    %360 = vmatpush1.xpose.msra.mxu0 0.0
    %361 = vmatprep.subr.mxu0 0.0
    %362 = vmatpush1.xpose.msra.mxu0 0.0
    %363 = vmatprep.subr.mxu0 0.0
    %364 = vmatpush1.xpose.msra.mxu0 0.0
    %365 = vmatprep.subr.mxu0 0.0
    %366 = vmatpush1.xpose.msra.mxu0 0.0
    %367 = vmatprep.mubr.f32.mxu0 0.0
    %368 = vmatmul.mubr.f32.gmra.mrb[0].mxu0 %v299
    %v369 = vpop.f32.mrb[0].mxu0
    %v370 = vadd.f32 0.0, %v369
    %v371 = vpop.f32.mrb[0].mxu0
    %372 = vdwg.mxu0
    %v373 = vsel %vm219, %v292, -inf
    %374 = vmax.xlane.f32.xlu0 %v373
    %v375 = vpop.xlane.xlu0 %374
    %v376 = vsel %vm219, %v370, -inf
    %377 = vmax.xlane.f32.xlu0 %v376
    %v378 = vpop.xlane.xlu0 %377
    %v379 = vsub.f32 %v292, %v375
    %v380 = vsub.f32 %v370, %v378
    %v381 = vmul.f32 %v379, 1.442695
    %v382 = vpow.pop %v381
    %v383 = vmul.f32 %v380, 1.442695
    %v384 = vpow.pop %v383
    %v385 = vsel %vm219, %v382, 0.0
    %386 = vadd.xlane.f32.xlu0 %v385
    %v387 = vpop.xlane.xlu0 %386
    %v388 = vsel %vm219, %v384, 0.0
    %389 = vadd.xlane.f32.xlu0 %v388
    %v390 = vpop.xlane.xlu0 %389
    %v391 = vrcp.pop %v387
    %v392 = vrcp.pop %v390
    %v393 = vmul.f32 %v382, %v391
    %v394 = vmul.f32 %v384, %v392
    %396 = vrot.lane.b32.xlu0 %v198, 64
    %v397 = vpop.permute.xlu0 %396
    %v400 = vsel %vm219, %v393, 0
    %402 = vmatprep.subr.mxu0 0.0
    %403 = vmatpush1.msra.mxu0 %v397
    %404 = vmatprep.subr.mxu0 0.0
    %405 = vmatpush1.msra.mxu0 0.0
    %406 = vmatprep.subr.mxu0 0.0
    %407 = vmatpush1.msra.mxu0 0.0
    %408 = vmatprep.subr.mxu0 0.0
    %409 = vmatpush1.msra.mxu0 0.0
    %410 = vmatprep.subr.mxu0 0.0
    %411 = vmatpush1.msra.mxu0 0.0
    %412 = vmatprep.subr.mxu0 0.0
    %413 = vmatpush1.msra.mxu0 0.0
    %414 = vmatprep.subr.mxu0 0.0
    %415 = vmatpush1.msra.mxu0 0.0
    %416 = vmatprep.subr.mxu0 0.0
    %417 = vmatpush1.msra.mxu0 0.0
    %418 = vmatprep.subr.mxu0 0.0
    %419 = vmatpush1.msra.mxu0 0.0
    %420 = vmatprep.subr.mxu0 0.0
    %421 = vmatpush1.msra.mxu0 0.0
    %422 = vmatprep.subr.mxu0 0.0
    %423 = vmatpush1.msra.mxu0 0.0
    %424 = vmatprep.subr.mxu0 0.0
    %425 = vmatpush1.msra.mxu0 0.0
    %426 = vmatprep.subr.mxu0 0.0
    %427 = vmatpush1.msra.mxu0 0.0
    %428 = vmatprep.subr.mxu0 0.0
    %429 = vmatpush1.msra.mxu0 0.0
    %430 = vmatprep.subr.mxu0 0.0
    %431 = vmatpush1.msra.mxu0 0.0
    %432 = vmatprep.subr.mxu0 0.0
    %433 = vmatpush1.msra.mxu0 0.0
    %434 = vmatprep.subr.mxu0 0.0
    %435 = vmatpush1.msra.mxu0 0.0
    %436 = vmatprep.subr.mxu0 0.0
    %437 = vmatpush1.msra.mxu0 0.0
    %438 = vmatprep.subr.mxu0 0.0
    %439 = vmatpush1.msra.mxu0 0.0
    %440 = vmatprep.subr.mxu0 0.0
    %441 = vmatpush1.msra.mxu0 0.0
    %442 = vmatprep.subr.mxu0 0.0
    %443 = vmatpush1.msra.mxu0 0.0
    %444 = vmatprep.subr.mxu0 0.0
    %445 = vmatpush1.msra.mxu0 0.0
    %446 = vmatprep.subr.mxu0 0.0
    %447 = vmatpush1.msra.mxu0 0.0
    %448 = vmatprep.subr.mxu0 0.0
    %449 = vmatpush1.msra.mxu0 0.0
    %450 = vmatprep.subr.mxu0 0.0
    %451 = vmatpush1.msra.mxu0 0.0
    %452 = vmatprep.subr.mxu0 0.0
    %453 = vmatpush1.msra.mxu0 0.0
    %454 = vmatprep.subr.mxu0 0.0
    %455 = vmatpush1.msra.mxu0 0.0
    %456 = vmatprep.subr.mxu0 0.0
    %457 = vmatpush1.msra.mxu0 0.0
    %458 = vmatprep.subr.mxu0 0.0
    %459 = vmatpush1.msra.mxu0 0.0
    %460 = vmatprep.subr.mxu0 0.0
    %461 = vmatpush1.msra.mxu0 0.0
    %462 = vmatprep.subr.mxu0 0.0
    %463 = vmatpush1.msra.mxu0 0.0
    %464 = vmatprep.subr.mxu0 0.0
    %465 = vmatpush1.msra.mxu0 0.0
    %466 = vmatprep.mubr.f32.mxu0 0.0
    %467 = vmatmul.mubr.f32.gmra.mrb[0].mxu0 %v400
    %v468 = vpop.f32.mrb[0].mxu0
    %v469 = vadd.f32 0.0, %v468
    %v470 = vpop.f32.mrb[0].mxu0
    %471 = vdwg.mxu0
    %473 = vrot.lane.b32.xlu0 %v213, 64
    %v474 = vpop.permute.xlu0 %473
    %v477 = vsel %vm219, %v394, 0
    %479 = vmatprep.subr.mxu0 0.0
    %480 = vmatpush1.msra.mxu0 %v474
    %481 = vmatprep.subr.mxu0 0.0
    %482 = vmatpush1.msra.mxu0 0.0
    %483 = vmatprep.subr.mxu0 0.0
    %484 = vmatpush1.msra.mxu0 0.0
    %485 = vmatprep.subr.mxu0 0.0
    %486 = vmatpush1.msra.mxu0 0.0
    %487 = vmatprep.subr.mxu0 0.0
    %488 = vmatpush1.msra.mxu0 0.0
    %489 = vmatprep.subr.mxu0 0.0
    %490 = vmatpush1.msra.mxu0 0.0
    %491 = vmatprep.subr.mxu0 0.0
    %492 = vmatpush1.msra.mxu0 0.0
    %493 = vmatprep.subr.mxu0 0.0
    %494 = vmatpush1.msra.mxu0 0.0
    %495 = vmatprep.subr.mxu0 0.0
    %496 = vmatpush1.msra.mxu0 0.0
    %497 = vmatprep.subr.mxu0 0.0
    %498 = vmatpush1.msra.mxu0 0.0
    %499 = vmatprep.subr.mxu0 0.0
    %500 = vmatpush1.msra.mxu0 0.0
    %501 = vmatprep.subr.mxu0 0.0
    %502 = vmatpush1.msra.mxu0 0.0
    %503 = vmatprep.subr.mxu0 0.0
    %504 = vmatpush1.msra.mxu0 0.0
    %505 = vmatprep.subr.mxu0 0.0
    %506 = vmatpush1.msra.mxu0 0.0
    %507 = vmatprep.subr.mxu0 0.0
    %508 = vmatpush1.msra.mxu0 0.0
    %509 = vmatprep.subr.mxu0 0.0
    %510 = vmatpush1.msra.mxu0 0.0
    %511 = vmatprep.subr.mxu0 0.0
    %512 = vmatpush1.msra.mxu0 0.0
    %513 = vmatprep.subr.mxu0 0.0
    %514 = vmatpush1.msra.mxu0 0.0
    %515 = vmatprep.subr.mxu0 0.0
    %516 = vmatpush1.msra.mxu0 0.0
    %517 = vmatprep.subr.mxu0 0.0
    %518 = vmatpush1.msra.mxu0 0.0
    %519 = vmatprep.subr.mxu0 0.0
    %520 = vmatpush1.msra.mxu0 0.0
    %521 = vmatprep.subr.mxu0 0.0
    %522 = vmatpush1.msra.mxu0 0.0
    %523 = vmatprep.subr.mxu0 0.0
    %524 = vmatpush1.msra.mxu0 0.0
    %525 = vmatprep.subr.mxu0 0.0
    %526 = vmatpush1.msra.mxu0 0.0
    %527 = vmatprep.subr.mxu0 0.0
    %528 = vmatpush1.msra.mxu0 0.0
    %529 = vmatprep.subr.mxu0 0.0
    %530 = vmatpush1.msra.mxu0 0.0
    %531 = vmatprep.subr.mxu0 0.0
    %532 = vmatpush1.msra.mxu0 0.0
    %533 = vmatprep.subr.mxu0 0.0
    %534 = vmatpush1.msra.mxu0 0.0
    %535 = vmatprep.subr.mxu0 0.0
    %536 = vmatpush1.msra.mxu0 0.0
    %537 = vmatprep.subr.mxu0 0.0
    %538 = vmatpush1.msra.mxu0 0.0
    %539 = vmatprep.subr.mxu0 0.0
    %540 = vmatpush1.msra.mxu0 0.0
    %541 = vmatprep.subr.mxu0 0.0
    %542 = vmatpush1.msra.mxu0 0.0
    %543 = vmatprep.mubr.f32.mxu0 0.0
    %544 = vmatmul.mubr.f32.gmra.mrb[0].mxu0 %v477
    %v545 = vpop.f32.mrb[0].mxu0
    %v546 = vadd.f32 0.0, %v545
    %v547 = vpop.f32.mrb[0].mxu0
    %548 = vdwg.mxu0
    %549 = vrot.lane.b32.xlu0 %v188, 120
    %v550 = vpop.permute.xlu0 %549
    %551 = vrot.lane.b32.xlu0 %v193, 88
    %v552 = vpop.permute.xlu0 %551
    %v553 = vsel %vm219, %v550, 0
    %v555 = vsel %vm219, %v552, 0
    %557 = vmatprep.subr.mxu0 0.0
    %558 = vmatpush1.xpose.msra.mxu0 %v555
    %559 = vmatprep.subr.mxu0 0.0
    %560 = vmatpush1.xpose.msra.mxu0 0.0
    %561 = vmatprep.subr.mxu0 0.0
    %562 = vmatpush1.xpose.msra.mxu0 0.0
    %563 = vmatprep.subr.mxu0 0.0
    %564 = vmatpush1.xpose.msra.mxu0 0.0
    %565 = vmatprep.subr.mxu0 0.0
    %566 = vmatpush1.xpose.msra.mxu0 0.0
    %567 = vmatprep.subr.mxu0 0.0
    %568 = vmatpush1.xpose.msra.mxu0 0.0
    %569 = vmatprep.subr.mxu0 0.0
    %570 = vmatpush1.xpose.msra.mxu0 0.0
    %571 = vmatprep.subr.mxu0 0.0
    %572 = vmatpush1.xpose.msra.mxu0 0.0
    %573 = vmatprep.subr.mxu0 0.0
    %574 = vmatpush1.xpose.msra.mxu0 0.0
    %575 = vmatprep.subr.mxu0 0.0
    %576 = vmatpush1.xpose.msra.mxu0 0.0
    %577 = vmatprep.subr.mxu0 0.0
    %578 = vmatpush1.xpose.msra.mxu0 0.0
    %579 = vmatprep.subr.mxu0 0.0
    %580 = vmatpush1.xpose.msra.mxu0 0.0
    %581 = vmatprep.subr.mxu0 0.0
    %582 = vmatpush1.xpose.msra.mxu0 0.0
    %583 = vmatprep.subr.mxu0 0.0
    %584 = vmatpush1.xpose.msra.mxu0 0.0
    %585 = vmatprep.subr.mxu0 0.0
    %586 = vmatpush1.xpose.msra.mxu0 0.0
    %587 = vmatprep.subr.mxu0 0.0
    %588 = vmatpush1.xpose.msra.mxu0 0.0
    %589 = vmatprep.subr.mxu0 0.0
    %590 = vmatpush1.xpose.msra.mxu0 0.0
    %591 = vmatprep.subr.mxu0 0.0
    %592 = vmatpush1.xpose.msra.mxu0 0.0
    %593 = vmatprep.subr.mxu0 0.0
    %594 = vmatpush1.xpose.msra.mxu0 0.0
    %595 = vmatprep.subr.mxu0 0.0
    %596 = vmatpush1.xpose.msra.mxu0 0.0
    %597 = vmatprep.subr.mxu0 0.0
    %598 = vmatpush1.xpose.msra.mxu0 0.0
    %599 = vmatprep.subr.mxu0 0.0
    %600 = vmatpush1.xpose.msra.mxu0 0.0
    %601 = vmatprep.subr.mxu0 0.0
    %602 = vmatpush1.xpose.msra.mxu0 0.0
    %603 = vmatprep.subr.mxu0 0.0
    %604 = vmatpush1.xpose.msra.mxu0 0.0
    %605 = vmatprep.subr.mxu0 0.0
    %606 = vmatpush1.xpose.msra.mxu0 0.0
    %607 = vmatprep.subr.mxu0 0.0
    %608 = vmatpush1.xpose.msra.mxu0 0.0
    %609 = vmatprep.subr.mxu0 0.0
    %610 = vmatpush1.xpose.msra.mxu0 0.0
    %611 = vmatprep.subr.mxu0 0.0
    %612 = vmatpush1.xpose.msra.mxu0 0.0
    %613 = vmatprep.subr.mxu0 0.0
    %614 = vmatpush1.xpose.msra.mxu0 0.0
    %615 = vmatprep.subr.mxu0 0.0
    %616 = vmatpush1.xpose.msra.mxu0 0.0
    %617 = vmatprep.subr.mxu0 0.0
    %618 = vmatpush1.xpose.msra.mxu0 0.0
    %619 = vmatprep.subr.mxu0 0.0
    %620 = vmatpush1.xpose.msra.mxu0 0.0
    %621 = vmatprep.mubr.f32.mxu0 0.0
    %622 = vmatmul.mubr.f32.gmra.mrb[0].mxu0 %v553
    %v623 = vpop.f32.mrb[0].mxu0
    %v624 = vadd.f32 0.0, %v623
    %v625 = vpop.f32.mrb[0].mxu0
    %626 = vdwg.mxu0
    %627 = vrot.lane.b32.xlu0 %v203, 120
    %v628 = vpop.permute.xlu0 %627
    %629 = vrot.lane.b32.xlu0 %v208, 88
    %v630 = vpop.permute.xlu0 %629
    %v631 = vsel %vm219, %v628, 0
    %v633 = vsel %vm219, %v630, 0
    %635 = vmatprep.subr.mxu0 0.0
    %636 = vmatpush1.xpose.msra.mxu0 %v633
    %637 = vmatprep.subr.mxu0 0.0
    %638 = vmatpush1.xpose.msra.mxu0 0.0
    %639 = vmatprep.subr.mxu0 0.0
    %640 = vmatpush1.xpose.msra.mxu0 0.0
    %641 = vmatprep.subr.mxu0 0.0
    %642 = vmatpush1.xpose.msra.mxu0 0.0
    %643 = vmatprep.subr.mxu0 0.0
    %644 = vmatpush1.xpose.msra.mxu0 0.0
    %645 = vmatprep.subr.mxu0 0.0
    %646 = vmatpush1.xpose.msra.mxu0 0.0
    %647 = vmatprep.subr.mxu0 0.0
    %648 = vmatpush1.xpose.msra.mxu0 0.0
    %649 = vmatprep.subr.mxu0 0.0
    %650 = vmatpush1.xpose.msra.mxu0 0.0
    %651 = vmatprep.subr.mxu0 0.0
    %652 = vmatpush1.xpose.msra.mxu0 0.0
    %653 = vmatprep.subr.mxu0 0.0
    %654 = vmatpush1.xpose.msra.mxu0 0.0
    %655 = vmatprep.subr.mxu0 0.0
    %656 = vmatpush1.xpose.msra.mxu0 0.0
    %657 = vmatprep.subr.mxu0 0.0
    %658 = vmatpush1.xpose.msra.mxu0 0.0
    %659 = vmatprep.subr.mxu0 0.0
    %660 = vmatpush1.xpose.msra.mxu0 0.0
    %661 = vmatprep.subr.mxu0 0.0
    %662 = vmatpush1.xpose.msra.mxu0 0.0
    %663 = vmatprep.subr.mxu0 0.0
    %664 = vmatpush1.xpose.msra.mxu0 0.0
    %665 = vmatprep.subr.mxu0 0.0
    %666 = vmatpush1.xpose.msra.mxu0 0.0
    %667 = vmatprep.subr.mxu0 0.0
    %668 = vmatpush1.xpose.msra.mxu0 0.0
    %669 = vmatprep.subr.mxu0 0.0
    %670 = vmatpush1.xpose.msra.mxu0 0.0
    %671 = vmatprep.subr.mxu0 0.0
    %672 = vmatpush1.xpose.msra.mxu0 0.0
    %673 = vmatprep.subr.mxu0 0.0
    %674 = vmatpush1.xpose.msra.mxu0 0.0
    %675 = vmatprep.subr.mxu0 0.0
    %676 = vmatpush1.xpose.msra.mxu0 0.0
    %677 = vmatprep.subr.mxu0 0.0
    %678 = vmatpush1.xpose.msra.mxu0 0.0
    %679 = vmatprep.subr.mxu0 0.0
    %680 = vmatpush1.xpose.msra.mxu0 0.0
    %681 = vmatprep.subr.mxu0 0.0
    %682 = vmatpush1.xpose.msra.mxu0 0.0
    %683 = vmatprep.subr.mxu0 0.0
    %684 = vmatpush1.xpose.msra.mxu0 0.0
    %685 = vmatprep.subr.mxu0 0.0
    %686 = vmatpush1.xpose.msra.mxu0 0.0
    %687 = vmatprep.subr.mxu0 0.0
    %688 = vmatpush1.xpose.msra.mxu0 0.0
    %689 = vmatprep.subr.mxu0 0.0
    %690 = vmatpush1.xpose.msra.mxu0 0.0
    %691 = vmatprep.subr.mxu0 0.0
    %692 = vmatpush1.xpose.msra.mxu0 0.0
    %693 = vmatprep.subr.mxu0 0.0
    %694 = vmatpush1.xpose.msra.mxu0 0.0
    %695 = vmatprep.subr.mxu0 0.0
    %696 = vmatpush1.xpose.msra.mxu0 0.0
    %697 = vmatprep.subr.mxu0 0.0
    %698 = vmatpush1.xpose.msra.mxu0 0.0
    %699 = vmatprep.mubr.f32.mxu0 0.0
    %700 = vmatmul.mubr.f32.gmra.mrb[0].mxu0 %v631
    %v701 = vpop.f32.mrb[0].mxu0
    %v702 = vadd.f32 0.0, %v701
    %v703 = vpop.f32.mrb[0].mxu0
    %704 = vdwg.mxu0
    %v705 = vsel %vm219, %v624, -inf
    %706 = vmax.xlane.f32.xlu0 %v705
    %v707 = vpop.xlane.xlu0 %706
    %v708 = vsel %vm219, %v702, -inf
    %709 = vmax.xlane.f32.xlu0 %v708
    %v710 = vpop.xlane.xlu0 %709
    %v711 = vsub.f32 %v624, %v707
    %v712 = vsub.f32 %v702, %v710
    %v713 = vmul.f32 %v711, 1.442695
    %v714 = vpow.pop %v713
    %v715 = vmul.f32 %v712, 1.442695
    %v716 = vpow.pop %v715
    %v717 = vsel %vm219, %v714, 0.0
    %718 = vadd.xlane.f32.xlu0 %v717
    %v719 = vpop.xlane.xlu0 %718
    %v720 = vsel %vm219, %v716, 0.0
    %721 = vadd.xlane.f32.xlu0 %v720
    %v722 = vpop.xlane.xlu0 %721
    %v723 = vrcp.pop %v719
    %v724 = vrcp.pop %v722
    %v725 = vmul.f32 %v714, %v723
    %v726 = vmul.f32 %v716, %v724
    %727 = vrot.lane.b32.xlu0 %v198, 56
    %v728 = vpop.permute.xlu0 %727
    %v731 = vsel %vm219, %v725, 0
    %733 = vmatprep.subr.mxu0 0.0
    %734 = vmatpush1.msra.mxu0 %v728
    %735 = vmatprep.subr.mxu0 0.0
    %736 = vmatpush1.msra.mxu0 0.0
    %737 = vmatprep.subr.mxu0 0.0
    %738 = vmatpush1.msra.mxu0 0.0
    %739 = vmatprep.subr.mxu0 0.0
    %740 = vmatpush1.msra.mxu0 0.0
    %741 = vmatprep.subr.mxu0 0.0
    %742 = vmatpush1.msra.mxu0 0.0
    %743 = vmatprep.subr.mxu0 0.0
    %744 = vmatpush1.msra.mxu0 0.0
    %745 = vmatprep.subr.mxu0 0.0
    %746 = vmatpush1.msra.mxu0 0.0
    %747 = vmatprep.subr.mxu0 0.0
    %748 = vmatpush1.msra.mxu0 0.0
    %749 = vmatprep.subr.mxu0 0.0
    %750 = vmatpush1.msra.mxu0 0.0
    %751 = vmatprep.subr.mxu0 0.0
    %752 = vmatpush1.msra.mxu0 0.0
    %753 = vmatprep.subr.mxu0 0.0
    %754 = vmatpush1.msra.mxu0 0.0
    %755 = vmatprep.subr.mxu0 0.0
    %756 = vmatpush1.msra.mxu0 0.0
    %757 = vmatprep.subr.mxu0 0.0
    %758 = vmatpush1.msra.mxu0 0.0
    %759 = vmatprep.subr.mxu0 0.0
    %760 = vmatpush1.msra.mxu0 0.0
    %761 = vmatprep.subr.mxu0 0.0
    %762 = vmatpush1.msra.mxu0 0.0
    %763 = vmatprep.subr.mxu0 0.0
    %764 = vmatpush1.msra.mxu0 0.0
    %765 = vmatprep.subr.mxu0 0.0
    %766 = vmatpush1.msra.mxu0 0.0
    %767 = vmatprep.subr.mxu0 0.0
    %768 = vmatpush1.msra.mxu0 0.0
    %769 = vmatprep.subr.mxu0 0.0
    %770 = vmatpush1.msra.mxu0 0.0
    %771 = vmatprep.subr.mxu0 0.0
    %772 = vmatpush1.msra.mxu0 0.0
    %773 = vmatprep.subr.mxu0 0.0
    %774 = vmatpush1.msra.mxu0 0.0
    %775 = vmatprep.subr.mxu0 0.0
    %776 = vmatpush1.msra.mxu0 0.0
    %777 = vmatprep.subr.mxu0 0.0
    %778 = vmatpush1.msra.mxu0 0.0
    %779 = vmatprep.subr.mxu0 0.0
    %780 = vmatpush1.msra.mxu0 0.0
    %781 = vmatprep.subr.mxu0 0.0
    %782 = vmatpush1.msra.mxu0 0.0
    %783 = vmatprep.subr.mxu0 0.0
    %784 = vmatpush1.msra.mxu0 0.0
    %785 = vmatprep.subr.mxu0 0.0
    %786 = vmatpush1.msra.mxu0 0.0
    %787 = vmatprep.subr.mxu0 0.0
    %788 = vmatpush1.msra.mxu0 0.0
    %789 = vmatprep.subr.mxu0 0.0
    %790 = vmatpush1.msra.mxu0 0.0
    %791 = vmatprep.subr.mxu0 0.0
    %792 = vmatpush1.msra.mxu0 0.0
    %793 = vmatprep.subr.mxu0 0.0
    %794 = vmatpush1.msra.mxu0 0.0
    %795 = vmatprep.subr.mxu0 0.0
    %796 = vmatpush1.msra.mxu0 0.0
    %797 = vmatprep.mubr.f32.mxu0 0.0
    %798 = vmatmul.mubr.f32.gmra.mrb[0].mxu0 %v731
    %v799 = vpop.f32.mrb[0].mxu0
    %v800 = vadd.f32 0.0, %v799
    %v801 = vpop.f32.mrb[0].mxu0
    %802 = vdwg.mxu0
    %803 = vrot.lane.b32.xlu0 %v213, 56
    %v804 = vpop.permute.xlu0 %803
    %v807 = vsel %vm219, %v726, 0
    %809 = vmatprep.subr.mxu0 0.0
    %810 = vmatpush1.msra.mxu0 %v804
    %811 = vmatprep.subr.mxu0 0.0
    %812 = vmatpush1.msra.mxu0 0.0
    %813 = vmatprep.subr.mxu0 0.0
    %814 = vmatpush1.msra.mxu0 0.0
    %815 = vmatprep.subr.mxu0 0.0
    %816 = vmatpush1.msra.mxu0 0.0
    %817 = vmatprep.subr.mxu0 0.0
    %818 = vmatpush1.msra.mxu0 0.0
    %819 = vmatprep.subr.mxu0 0.0
    %820 = vmatpush1.msra.mxu0 0.0
    %821 = vmatprep.subr.mxu0 0.0
    %822 = vmatpush1.msra.mxu0 0.0
    %823 = vmatprep.subr.mxu0 0.0
    %824 = vmatpush1.msra.mxu0 0.0
    %825 = vmatprep.subr.mxu0 0.0
    %826 = vmatpush1.msra.mxu0 0.0
    %827 = vmatprep.subr.mxu0 0.0
    %828 = vmatpush1.msra.mxu0 0.0
    %829 = vmatprep.subr.mxu0 0.0
    %830 = vmatpush1.msra.mxu0 0.0
    %831 = vmatprep.subr.mxu0 0.0
    %832 = vmatpush1.msra.mxu0 0.0
    %833 = vmatprep.subr.mxu0 0.0
    %834 = vmatpush1.msra.mxu0 0.0
    %835 = vmatprep.subr.mxu0 0.0
    %836 = vmatpush1.msra.mxu0 0.0
    %837 = vmatprep.subr.mxu0 0.0
    %838 = vmatpush1.msra.mxu0 0.0
    %839 = vmatprep.subr.mxu0 0.0
    %840 = vmatpush1.msra.mxu0 0.0
    %841 = vmatprep.subr.mxu0 0.0
    %842 = vmatpush1.msra.mxu0 0.0
    %843 = vmatprep.subr.mxu0 0.0
    %844 = vmatpush1.msra.mxu0 0.0
    %845 = vmatprep.subr.mxu0 0.0
    %846 = vmatpush1.msra.mxu0 0.0
    %847 = vmatprep.subr.mxu0 0.0
    %848 = vmatpush1.msra.mxu0 0.0
    %849 = vmatprep.subr.mxu0 0.0
    %850 = vmatpush1.msra.mxu0 0.0
    %851 = vmatprep.subr.mxu0 0.0
    %852 = vmatpush1.msra.mxu0 0.0
    %853 = vmatprep.subr.mxu0 0.0
    %854 = vmatpush1.msra.mxu0 0.0
    %855 = vmatprep.subr.mxu0 0.0
    %856 = vmatpush1.msra.mxu0 0.0
    %857 = vmatprep.subr.mxu0 0.0
    %858 = vmatpush1.msra.mxu0 0.0
    %859 = vmatprep.subr.mxu0 0.0
    %860 = vmatpush1.msra.mxu0 0.0
    %861 = vmatprep.subr.mxu0 0.0
    %862 = vmatpush1.msra.mxu0 0.0
    %863 = vmatprep.subr.mxu0 0.0
    %864 = vmatpush1.msra.mxu0 0.0
    %865 = vmatprep.subr.mxu0 0.0
    %866 = vmatpush1.msra.mxu0 0.0
    %867 = vmatprep.subr.mxu0 0.0
    %868 = vmatpush1.msra.mxu0 0.0
    %869 = vmatprep.subr.mxu0 0.0
    %870 = vmatpush1.msra.mxu0 0.0
    %871 = vmatprep.subr.mxu0 0.0
    %872 = vmatpush1.msra.mxu0 0.0
    %873 = vmatprep.mubr.f32.mxu0 0.0
    %874 = vmatmul.mubr.f32.gmra.mrb[0].mxu0 %v807
    %v875 = vpop.f32.mrb[0].mxu0
    %v876 = vadd.f32 0.0, %v875
    %v877 = vpop.f32.mrb[0].mxu0
    %878 = vdwg.mxu0
    %879 = vrot.lane.b32.xlu0 %v188, 112
    %v880 = vpop.permute.xlu0 %879
    %881 = vrot.lane.b32.xlu0 %v193, 80
    %v882 = vpop.permute.xlu0 %881
    %v883 = vsel %vm219, %v880, 0
    %v885 = vsel %vm219, %v882, 0
    %887 = vmatprep.subr.mxu0 0.0
    %888 = vmatpush1.xpose.msra.mxu0 %v885
    %889 = vmatprep.subr.mxu0 0.0
    %890 = vmatpush1.xpose.msra.mxu0 0.0
    %891 = vmatprep.subr.mxu0 0.0
    %892 = vmatpush1.xpose.msra.mxu0 0.0
    %893 = vmatprep.subr.mxu0 0.0
    %894 = vmatpush1.xpose.msra.mxu0 0.0
    %895 = vmatprep.subr.mxu0 0.0
    %896 = vmatpush1.xpose.msra.mxu0 0.0
    %897 = vmatprep.subr.mxu0 0.0
    %898 = vmatpush1.xpose.msra.mxu0 0.0
    %899 = vmatprep.subr.mxu0 0.0
    %900 = vmatpush1.xpose.msra.mxu0 0.0
    %901 = vmatprep.subr.mxu0 0.0
    %902 = vmatpush1.xpose.msra.mxu0 0.0
    %903 = vmatprep.subr.mxu0 0.0
    %904 = vmatpush1.xpose.msra.mxu0 0.0
    %905 = vmatprep.subr.mxu0 0.0
    %906 = vmatpush1.xpose.msra.mxu0 0.0
    %907 = vmatprep.subr.mxu0 0.0
    %908 = vmatpush1.xpose.msra.mxu0 0.0
    %909 = vmatprep.subr.mxu0 0.0
    %910 = vmatpush1.xpose.msra.mxu0 0.0
    %911 = vmatprep.subr.mxu0 0.0
    %912 = vmatpush1.xpose.msra.mxu0 0.0
    %913 = vmatprep.subr.mxu0 0.0
    %914 = vmatpush1.xpose.msra.mxu0 0.0
    %915 = vmatprep.subr.mxu0 0.0
    %916 = vmatpush1.xpose.msra.mxu0 0.0
    %917 = vmatprep.subr.mxu0 0.0
    %918 = vmatpush1.xpose.msra.mxu0 0.0
    %919 = vmatprep.subr.mxu0 0.0
    %920 = vmatpush1.xpose.msra.mxu0 0.0
    %921 = vmatprep.subr.mxu0 0.0
    %922 = vmatpush1.xpose.msra.mxu0 0.0
    %923 = vmatprep.subr.mxu0 0.0
    %924 = vmatpush1.xpose.msra.mxu0 0.0
    %925 = vmatprep.subr.mxu0 0.0
    %926 = vmatpush1.xpose.msra.mxu0 0.0
    %927 = vmatprep.subr.mxu0 0.0
    %928 = vmatpush1.xpose.msra.mxu0 0.0
    %929 = vmatprep.subr.mxu0 0.0
    %930 = vmatpush1.xpose.msra.mxu0 0.0
    %931 = vmatprep.subr.mxu0 0.0
    %932 = vmatpush1.xpose.msra.mxu0 0.0
    %933 = vmatprep.subr.mxu0 0.0
    %934 = vmatpush1.xpose.msra.mxu0 0.0
    %935 = vmatprep.subr.mxu0 0.0
    %936 = vmatpush1.xpose.msra.mxu0 0.0
    %937 = vmatprep.subr.mxu0 0.0
    %938 = vmatpush1.xpose.msra.mxu0 0.0
    %939 = vmatprep.subr.mxu0 0.0
    %940 = vmatpush1.xpose.msra.mxu0 0.0
    %941 = vmatprep.subr.mxu0 0.0
    %942 = vmatpush1.xpose.msra.mxu0 0.0
    %943 = vmatprep.subr.mxu0 0.0
    %944 = vmatpush1.xpose.msra.mxu0 0.0
    %945 = vmatprep.subr.mxu0 0.0
    %946 = vmatpush1.xpose.msra.mxu0 0.0
    %947 = vmatprep.subr.mxu0 0.0
    %948 = vmatpush1.xpose.msra.mxu0 0.0
    %949 = vmatprep.subr.mxu0 0.0
    %950 = vmatpush1.xpose.msra.mxu0 0.0
    %951 = vmatprep.mubr.f32.mxu0 0.0
    %952 = vmatmul.mubr.f32.gmra.mrb[0].mxu0 %v883
    %v953 = vpop.f32.mrb[0].mxu0
    %v954 = vadd.f32 0.0, %v953
    %v955 = vpop.f32.mrb[0].mxu0
    %956 = vdwg.mxu0
    %957 = vrot.lane.b32.xlu0 %v203, 112
    %v958 = vpop.permute.xlu0 %957
    %959 = vrot.lane.b32.xlu0 %v208, 80
    %v960 = vpop.permute.xlu0 %959
    %v961 = vsel %vm219, %v958, 0
    %v963 = vsel %vm219, %v960, 0
    %965 = vmatprep.subr.mxu0 0.0
    %966 = vmatpush1.xpose.msra.mxu0 %v963
    %967 = vmatprep.subr.mxu0 0.0
    %968 = vmatpush1.xpose.msra.mxu0 0.0
    %969 = vmatprep.subr.mxu0 0.0
    %970 = vmatpush1.xpose.msra.mxu0 0.0
    %971 = vmatprep.subr.mxu0 0.0
    %972 = vmatpush1.xpose.msra.mxu0 0.0
    %973 = vmatprep.subr.mxu0 0.0
    %974 = vmatpush1.xpose.msra.mxu0 0.0
    %975 = vmatprep.subr.mxu0 0.0
    %976 = vmatpush1.xpose.msra.mxu0 0.0
    %977 = vmatprep.subr.mxu0 0.0
    %978 = vmatpush1.xpose.msra.mxu0 0.0
    %979 = vmatprep.subr.mxu0 0.0
    %980 = vmatpush1.xpose.msra.mxu0 0.0
    %981 = vmatprep.subr.mxu0 0.0
    %982 = vmatpush1.xpose.msra.mxu0 0.0
    %983 = vmatprep.subr.mxu0 0.0
    %984 = vmatpush1.xpose.msra.mxu0 0.0
    %985 = vmatprep.subr.mxu0 0.0
    %986 = vmatpush1.xpose.msra.mxu0 0.0
    %987 = vmatprep.subr.mxu0 0.0
    %988 = vmatpush1.xpose.msra.mxu0 0.0
    %989 = vmatprep.subr.mxu0 0.0
    %990 = vmatpush1.xpose.msra.mxu0 0.0
    %991 = vmatprep.subr.mxu0 0.0
    %992 = vmatpush1.xpose.msra.mxu0 0.0
    %993 = vmatprep.subr.mxu0 0.0
    %994 = vmatpush1.xpose.msra.mxu0 0.0
    %995 = vmatprep.subr.mxu0 0.0
    %996 = vmatpush1.xpose.msra.mxu0 0.0
    %997 = vmatprep.subr.mxu0 0.0
    %998 = vmatpush1.xpose.msra.mxu0 0.0
    %999 = vmatprep.subr.mxu0 0.0
    %1000 = vmatpush1.xpose.msra.mxu0 0.0
    %1001 = vmatprep.subr.mxu0 0.0
    %1002 = vmatpush1.xpose.msra.mxu0 0.0
    %1003 = vmatprep.subr.mxu0 0.0
    %1004 = vmatpush1.xpose.msra.mxu0 0.0
    %1005 = vmatprep.subr.mxu0 0.0
    %1006 = vmatpush1.xpose.msra.mxu0 0.0
    %1007 = vmatprep.subr.mxu0 0.0
    %1008 = vmatpush1.xpose.msra.mxu0 0.0
    %1009 = vmatprep.subr.mxu0 0.0
    %1010 = vmatpush1.xpose.msra.mxu0 0.0
    %1011 = vmatprep.subr.mxu0 0.0
    %1012 = vmatpush1.xpose.msra.mxu0 0.0
    %1013 = vmatprep.subr.mxu0 0.0
    %1014 = vmatpush1.xpose.msra.mxu0 0.0
    %1015 = vmatprep.subr.mxu0 0.0
    %1016 = vmatpush1.xpose.msra.mxu0 0.0
    %1017 = vmatprep.subr.mxu0 0.0
    %1018 = vmatpush1.xpose.msra.mxu0 0.0
    %1019 = vmatprep.subr.mxu0 0.0
    %1020 = vmatpush1.xpose.msra.mxu0 0.0
    %1021 = vmatprep.subr.mxu0 0.0
    %1022 = vmatpush1.xpose.msra.mxu0 0.0
    %1023 = vmatprep.subr.mxu0 0.0
    %1024 = vmatpush1.xpose.msra.mxu0 0.0
    %1025 = vmatprep.subr.mxu0 0.0
    %1026 = vmatpush1.xpose.msra.mxu0 0.0
    %1027 = vmatprep.subr.mxu0 0.0
    %1028 = vmatpush1.xpose.msra.mxu0 0.0
    %1029 = vmatprep.mubr.f32.mxu0 0.0
    %1030 = vmatmul.mubr.f32.gmra.mrb[0].mxu0 %v961
    %v1031 = vpop.f32.mrb[0].mxu0
    %v1032 = vadd.f32 0.0, %v1031
    %v1033 = vpop.f32.mrb[0].mxu0
    %1034 = vdwg.mxu0
    %v1035 = vsel %vm219, %v954, -inf
    %1036 = vmax.xlane.f32.xlu0 %v1035
    %v1037 = vpop.xlane.xlu0 %1036
    %v1038 = vsel %vm219, %v1032, -inf
    %1039 = vmax.xlane.f32.xlu0 %v1038
    %v1040 = vpop.xlane.xlu0 %1039
    %v1041 = vsub.f32 %v954, %v1037
    %v1042 = vsub.f32 %v1032, %v1040
    %v1043 = vmul.f32 %v1041, 1.442695
    %v1044 = vpow.pop %v1043
    %v1045 = vmul.f32 %v1042, 1.442695
    %v1046 = vpow.pop %v1045
    %v1047 = vsel %vm219, %v1044, 0.0
    %1048 = vadd.xlane.f32.xlu0 %v1047
    %v1049 = vpop.xlane.xlu0 %1048
    %v1050 = vsel %vm219, %v1046, 0.0
    %1051 = vadd.xlane.f32.xlu0 %v1050
    %v1052 = vpop.xlane.xlu0 %1051
    %v1053 = vrcp.pop %v1049
    %v1054 = vrcp.pop %v1052
    %v1055 = vmul.f32 %v1044, %v1053
    %v1056 = vmul.f32 %v1046, %v1054
    %1057 = vrot.lane.b32.xlu0 %v198, 48
    %v1058 = vpop.permute.xlu0 %1057
    %v1061 = vsel %vm219, %v1055, 0
    %1063 = vmatprep.subr.mxu0 0.0
    %1064 = vmatpush1.msra.mxu0 %v1058
    %1065 = vmatprep.subr.mxu0 0.0
    %1066 = vmatpush1.msra.mxu0 0.0
    %1067 = vmatprep.subr.mxu0 0.0
    %1068 = vmatpush1.msra.mxu0 0.0
    %1069 = vmatprep.subr.mxu0 0.0
    %1070 = vmatpush1.msra.mxu0 0.0
    %1071 = vmatprep.subr.mxu0 0.0
    %1072 = vmatpush1.msra.mxu0 0.0
    %1073 = vmatprep.subr.mxu0 0.0
    %1074 = vmatpush1.msra.mxu0 0.0
    %1075 = vmatprep.subr.mxu0 0.0
    %1076 = vmatpush1.msra.mxu0 0.0
    %1077 = vmatprep.subr.mxu0 0.0
    %1078 = vmatpush1.msra.mxu0 0.0
    %1079 = vmatprep.subr.mxu0 0.0
    %1080 = vmatpush1.msra.mxu0 0.0
    %1081 = vmatprep.subr.mxu0 0.0
    %1082 = vmatpush1.msra.mxu0 0.0
    %1083 = vmatprep.subr.mxu0 0.0
    %1084 = vmatpush1.msra.mxu0 0.0
    %1085 = vmatprep.subr.mxu0 0.0
    %1086 = vmatpush1.msra.mxu0 0.0
    %1087 = vmatprep.subr.mxu0 0.0
    %1088 = vmatpush1.msra.mxu0 0.0
    %1089 = vmatprep.subr.mxu0 0.0
    %1090 = vmatpush1.msra.mxu0 0.0
    %1091 = vmatprep.subr.mxu0 0.0
    %1092 = vmatpush1.msra.mxu0 0.0
    %1093 = vmatprep.subr.mxu0 0.0
    %1094 = vmatpush1.msra.mxu0 0.0
    %1095 = vmatprep.subr.mxu0 0.0
    %1096 = vmatpush1.msra.mxu0 0.0
    %1097 = vmatprep.subr.mxu0 0.0
    %1098 = vmatpush1.msra.mxu0 0.0
    %1099 = vmatprep.subr.mxu0 0.0
    %1100 = vmatpush1.msra.mxu0 0.0
    %1101 = vmatprep.subr.mxu0 0.0
    %1102 = vmatpush1.msra.mxu0 0.0
    %1103 = vmatprep.subr.mxu0 0.0
    %1104 = vmatpush1.msra.mxu0 0.0
    %1105 = vmatprep.subr.mxu0 0.0
    %1106 = vmatpush1.msra.mxu0 0.0
    %1107 = vmatprep.subr.mxu0 0.0
    %1108 = vmatpush1.msra.mxu0 0.0
    %1109 = vmatprep.subr.mxu0 0.0
    %1110 = vmatpush1.msra.mxu0 0.0
    %1111 = vmatprep.subr.mxu0 0.0
    %1112 = vmatpush1.msra.mxu0 0.0
    %1113 = vmatprep.subr.mxu0 0.0
    %1114 = vmatpush1.msra.mxu0 0.0
    %1115 = vmatprep.subr.mxu0 0.0
    %1116 = vmatpush1.msra.mxu0 0.0
    %1117 = vmatprep.subr.mxu0 0.0
    %1118 = vmatpush1.msra.mxu0 0.0
    %1119 = vmatprep.subr.mxu0 0.0
    %1120 = vmatpush1.msra.mxu0 0.0
    %1121 = vmatprep.subr.mxu0 0.0
    %1122 = vmatpush1.msra.mxu0 0.0
    %1123 = vmatprep.subr.mxu0 0.0
    %1124 = vmatpush1.msra.mxu0 0.0
    %1125 = vmatprep.subr.mxu0 0.0
    %1126 = vmatpush1.msra.mxu0 0.0
    %1127 = vmatprep.mubr.f32.mxu0 0.0
    %1128 = vmatmul.mubr.f32.gmra.mrb[0].mxu0 %v1061
    %v1129 = vpop.f32.mrb[0].mxu0
    %v1130 = vadd.f32 0.0, %v1129
    %v1131 = vpop.f32.mrb[0].mxu0
    %1132 = vdwg.mxu0
    %1133 = vrot.lane.b32.xlu0 %v213, 48
    %v1134 = vpop.permute.xlu0 %1133
    %v1137 = vsel %vm219, %v1056, 0
    %1139 = vmatprep.subr.mxu0 0.0
    %1140 = vmatpush1.msra.mxu0 %v1134
    %1141 = vmatprep.subr.mxu0 0.0
    %1142 = vmatpush1.msra.mxu0 0.0
    %1143 = vmatprep.subr.mxu0 0.0
    %1144 = vmatpush1.msra.mxu0 0.0
    %1145 = vmatprep.subr.mxu0 0.0
    %1146 = vmatpush1.msra.mxu0 0.0
    %1147 = vmatprep.subr.mxu0 0.0
    %1148 = vmatpush1.msra.mxu0 0.0
    %1149 = vmatprep.subr.mxu0 0.0
    %1150 = vmatpush1.msra.mxu0 0.0
    %1151 = vmatprep.subr.mxu0 0.0
    %1152 = vmatpush1.msra.mxu0 0.0
    %1153 = vmatprep.subr.mxu0 0.0
    %1154 = vmatpush1.msra.mxu0 0.0
    %1155 = vmatprep.subr.mxu0 0.0
    %1156 = vmatpush1.msra.mxu0 0.0
    %1157 = vmatprep.subr.mxu0 0.0
    %1158 = vmatpush1.msra.mxu0 0.0
    %1159 = vmatprep.subr.mxu0 0.0
    %1160 = vmatpush1.msra.mxu0 0.0
    %1161 = vmatprep.subr.mxu0 0.0
    %1162 = vmatpush1.msra.mxu0 0.0
    %1163 = vmatprep.subr.mxu0 0.0
    %1164 = vmatpush1.msra.mxu0 0.0
    %1165 = vmatprep.subr.mxu0 0.0
    %1166 = vmatpush1.msra.mxu0 0.0
    %1167 = vmatprep.subr.mxu0 0.0
    %1168 = vmatpush1.msra.mxu0 0.0
    %1169 = vmatprep.subr.mxu0 0.0
    %1170 = vmatpush1.msra.mxu0 0.0
    %1171 = vmatprep.subr.mxu0 0.0
    %1172 = vmatpush1.msra.mxu0 0.0
    %1173 = vmatprep.subr.mxu0 0.0
    %1174 = vmatpush1.msra.mxu0 0.0
    %1175 = vmatprep.subr.mxu0 0.0
    %1176 = vmatpush1.msra.mxu0 0.0
    %1177 = vmatprep.subr.mxu0 0.0
    %1178 = vmatpush1.msra.mxu0 0.0
    %1179 = vmatprep.subr.mxu0 0.0
    %1180 = vmatpush1.msra.mxu0 0.0
    %1181 = vmatprep.subr.mxu0 0.0
    %1182 = vmatpush1.msra.mxu0 0.0
    %1183 = vmatprep.subr.mxu0 0.0
    %1184 = vmatpush1.msra.mxu0 0.0
    %1185 = vmatprep.subr.mxu0 0.0
    %1186 = vmatpush1.msra.mxu0 0.0
    %1187 = vmatprep.subr.mxu0 0.0
    %1188 = vmatpush1.msra.mxu0 0.0
    %1189 = vmatprep.subr.mxu0 0.0
    %1190 = vmatpush1.msra.mxu0 0.0
    %1191 = vmatprep.subr.mxu0 0.0
    %1192 = vmatpush1.msra.mxu0 0.0
    %1193 = vmatprep.subr.mxu0 0.0
    %1194 = vmatpush1.msra.mxu0 0.0
    %1195 = vmatprep.subr.mxu0 0.0
    %1196 = vmatpush1.msra.mxu0 0.0
    %1197 = vmatprep.subr.mxu0 0.0
    %1198 = vmatpush1.msra.mxu0 0.0
    %1199 = vmatprep.subr.mxu0 0.0
    %1200 = vmatpush1.msra.mxu0 0.0
    %1201 = vmatprep.subr.mxu0 0.0
    %1202 = vmatpush1.msra.mxu0 0.0
    %1203 = vmatprep.mubr.f32.mxu0 0.0
    %1204 = vmatmul.mubr.f32.gmra.mrb[0].mxu0 %v1137
    %v1205 = vpop.f32.mrb[0].mxu0
    %v1206 = vadd.f32 0.0, %v1205
    %v1207 = vpop.f32.mrb[0].mxu0
    %1208 = vdwg.mxu0
    %1209 = vrot.lane.b32.xlu0 %v188, 104
    %v1210 = vpop.permute.xlu0 %1209
    %1211 = vrot.lane.b32.xlu0 %v193, 72
    %v1212 = vpop.permute.xlu0 %1211
    %v1213 = vsel %vm219, %v1210, 0
    %v1215 = vsel %vm219, %v1212, 0
    %1217 = vmatprep.subr.mxu0 0.0
    %1218 = vmatpush1.xpose.msra.mxu0 %v1215
    %1219 = vmatprep.subr.mxu0 0.0
    %1220 = vmatpush1.xpose.msra.mxu0 0.0
    %1221 = vmatprep.subr.mxu0 0.0
    %1222 = vmatpush1.xpose.msra.mxu0 0.0
    %1223 = vmatprep.subr.mxu0 0.0
    %1224 = vmatpush1.xpose.msra.mxu0 0.0
    %1225 = vmatprep.subr.mxu0 0.0
    %1226 = vmatpush1.xpose.msra.mxu0 0.0
    %1227 = vmatprep.subr.mxu0 0.0
    %1228 = vmatpush1.xpose.msra.mxu0 0.0
    %1229 = vmatprep.subr.mxu0 0.0
    %1230 = vmatpush1.xpose.msra.mxu0 0.0
    %1231 = vmatprep.subr.mxu0 0.0
    %1232 = vmatpush1.xpose.msra.mxu0 0.0
    %1233 = vmatprep.subr.mxu0 0.0
    %1234 = vmatpush1.xpose.msra.mxu0 0.0
    %1235 = vmatprep.subr.mxu0 0.0
    %1236 = vmatpush1.xpose.msra.mxu0 0.0
    %1237 = vmatprep.subr.mxu0 0.0
    %1238 = vmatpush1.xpose.msra.mxu0 0.0
    %1239 = vmatprep.subr.mxu0 0.0
    %1240 = vmatpush1.xpose.msra.mxu0 0.0
    %1241 = vmatprep.subr.mxu0 0.0
    %1242 = vmatpush1.xpose.msra.mxu0 0.0
    %1243 = vmatprep.subr.mxu0 0.0
    %1244 = vmatpush1.xpose.msra.mxu0 0.0
    %1245 = vmatprep.subr.mxu0 0.0
    %1246 = vmatpush1.xpose.msra.mxu0 0.0
    %1247 = vmatprep.subr.mxu0 0.0
    %1248 = vmatpush1.xpose.msra.mxu0 0.0
    %1249 = vmatprep.subr.mxu0 0.0
    %1250 = vmatpush1.xpose.msra.mxu0 0.0
    %1251 = vmatprep.subr.mxu0 0.0
    %1252 = vmatpush1.xpose.msra.mxu0 0.0
    %1253 = vmatprep.subr.mxu0 0.0
    %1254 = vmatpush1.xpose.msra.mxu0 0.0
    %1255 = vmatprep.subr.mxu0 0.0
    %1256 = vmatpush1.xpose.msra.mxu0 0.0
    %1257 = vmatprep.subr.mxu0 0.0
    %1258 = vmatpush1.xpose.msra.mxu0 0.0
    %1259 = vmatprep.subr.mxu0 0.0
    %1260 = vmatpush1.xpose.msra.mxu0 0.0
    %1261 = vmatprep.subr.mxu0 0.0
    %1262 = vmatpush1.xpose.msra.mxu0 0.0
    %1263 = vmatprep.subr.mxu0 0.0
    %1264 = vmatpush1.xpose.msra.mxu0 0.0
    %1265 = vmatprep.subr.mxu0 0.0
    %1266 = vmatpush1.xpose.msra.mxu0 0.0
    %1267 = vmatprep.subr.mxu0 0.0
    %1268 = vmatpush1.xpose.msra.mxu0 0.0
    %1269 = vmatprep.subr.mxu0 0.0
    %1270 = vmatpush1.xpose.msra.mxu0 0.0
    %1271 = vmatprep.subr.mxu0 0.0
    %1272 = vmatpush1.xpose.msra.mxu0 0.0
    %1273 = vmatprep.subr.mxu0 0.0
    %1274 = vmatpush1.xpose.msra.mxu0 0.0
    %1275 = vmatprep.subr.mxu0 0.0
    %1276 = vmatpush1.xpose.msra.mxu0 0.0
    %1277 = vmatprep.subr.mxu0 0.0
    %1278 = vmatpush1.xpose.msra.mxu0 0.0
    %1279 = vmatprep.subr.mxu0 0.0
    %1280 = vmatpush1.xpose.msra.mxu0 0.0
    %1281 = vmatprep.mubr.f32.mxu0 0.0
    %1282 = vmatmul.mubr.f32.gmra.mrb[0].mxu0 %v1213
    %v1283 = vpop.f32.mrb[0].mxu0
    %v1284 = vadd.f32 0.0, %v1283
    %v1285 = vpop.f32.mrb[0].mxu0
    %1286 = vdwg.mxu0
    %1287 = vrot.lane.b32.xlu0 %v203, 104
    %v1288 = vpop.permute.xlu0 %1287
    %1289 = vrot.lane.b32.xlu0 %v208, 72
    %v1290 = vpop.permute.xlu0 %1289
    %v1291 = vsel %vm219, %v1288, 0
    %v1293 = vsel %vm219, %v1290, 0
    %1295 = vmatprep.subr.mxu0 0.0
    %1296 = vmatpush1.xpose.msra.mxu0 %v1293
    %1297 = vmatprep.subr.mxu0 0.0
    %1298 = vmatpush1.xpose.msra.mxu0 0.0
    %1299 = vmatprep.subr.mxu0 0.0
    %1300 = vmatpush1.xpose.msra.mxu0 0.0
    %1301 = vmatprep.subr.mxu0 0.0
    %1302 = vmatpush1.xpose.msra.mxu0 0.0
    %1303 = vmatprep.subr.mxu0 0.0
    %1304 = vmatpush1.xpose.msra.mxu0 0.0
    %1305 = vmatprep.subr.mxu0 0.0
    %1306 = vmatpush1.xpose.msra.mxu0 0.0
    %1307 = vmatprep.subr.mxu0 0.0
    %1308 = vmatpush1.xpose.msra.mxu0 0.0
    %1309 = vmatprep.subr.mxu0 0.0
    %1310 = vmatpush1.xpose.msra.mxu0 0.0
    %1311 = vmatprep.subr.mxu0 0.0
    %1312 = vmatpush1.xpose.msra.mxu0 0.0
    %1313 = vmatprep.subr.mxu0 0.0
    %1314 = vmatpush1.xpose.msra.mxu0 0.0
    %1315 = vmatprep.subr.mxu0 0.0
    %1316 = vmatpush1.xpose.msra.mxu0 0.0
    %1317 = vmatprep.subr.mxu0 0.0
    %1318 = vmatpush1.xpose.msra.mxu0 0.0
    %1319 = vmatprep.subr.mxu0 0.0
    %1320 = vmatpush1.xpose.msra.mxu0 0.0
    %1321 = vmatprep.subr.mxu0 0.0
    %1322 = vmatpush1.xpose.msra.mxu0 0.0
    %1323 = vmatprep.subr.mxu0 0.0
    %1324 = vmatpush1.xpose.msra.mxu0 0.0
    %1325 = vmatprep.subr.mxu0 0.0
    %1326 = vmatpush1.xpose.msra.mxu0 0.0
    %1327 = vmatprep.subr.mxu0 0.0
    %1328 = vmatpush1.xpose.msra.mxu0 0.0
    %1329 = vmatprep.subr.mxu0 0.0
    %1330 = vmatpush1.xpose.msra.mxu0 0.0
    %1331 = vmatprep.subr.mxu0 0.0
    %1332 = vmatpush1.xpose.msra.mxu0 0.0
    %1333 = vmatprep.subr.mxu0 0.0
    %1334 = vmatpush1.xpose.msra.mxu0 0.0
    %1335 = vmatprep.subr.mxu0 0.0
    %1336 = vmatpush1.xpose.msra.mxu0 0.0
    %1337 = vmatprep.subr.mxu0 0.0
    %1338 = vmatpush1.xpose.msra.mxu0 0.0
    %1339 = vmatprep.subr.mxu0 0.0
    %1340 = vmatpush1.xpose.msra.mxu0 0.0
    %1341 = vmatprep.subr.mxu0 0.0
    %1342 = vmatpush1.xpose.msra.mxu0 0.0
    %1343 = vmatprep.subr.mxu0 0.0
    %1344 = vmatpush1.xpose.msra.mxu0 0.0
    %1345 = vmatprep.subr.mxu0 0.0
    %1346 = vmatpush1.xpose.msra.mxu0 0.0
    %1347 = vmatprep.subr.mxu0 0.0
    %1348 = vmatpush1.xpose.msra.mxu0 0.0
    %1349 = vmatprep.subr.mxu0 0.0
    %1350 = vmatpush1.xpose.msra.mxu0 0.0
    %1351 = vmatprep.subr.mxu0 0.0
    %1352 = vmatpush1.xpose.msra.mxu0 0.0
    %1353 = vmatprep.subr.mxu0 0.0
    %1354 = vmatpush1.xpose.msra.mxu0 0.0
    %1355 = vmatprep.subr.mxu0 0.0
    %1356 = vmatpush1.xpose.msra.mxu0 0.0
    %1357 = vmatprep.subr.mxu0 0.0
    %1358 = vmatpush1.xpose.msra.mxu0 0.0
    %1359 = vmatprep.mubr.f32.mxu0 0.0
    %1360 = vmatmul.mubr.f32.gmra.mrb[0].mxu0 %v1291
    %v1361 = vpop.f32.mrb[0].mxu0
    %v1362 = vadd.f32 0.0, %v1361
    %v1363 = vpop.f32.mrb[0].mxu0
    %1364 = vdwg.mxu0
    %v1365 = vsel %vm219, %v1284, -inf
    %1366 = vmax.xlane.f32.xlu0 %v1365
    %v1367 = vpop.xlane.xlu0 %1366
    %v1368 = vsel %vm219, %v1362, -inf
    %1369 = vmax.xlane.f32.xlu0 %v1368
    %v1370 = vpop.xlane.xlu0 %1369
    %v1371 = vsub.f32 %v1284, %v1367
    %v1372 = vsub.f32 %v1362, %v1370
    %v1373 = vmul.f32 %v1371, 1.442695
    %v1374 = vpow.pop %v1373
    %v1375 = vmul.f32 %v1372, 1.442695
    %v1376 = vpow.pop %v1375
    %v1377 = vsel %vm219, %v1374, 0.0
    %1378 = vadd.xlane.f32.xlu0 %v1377
    %v1379 = vpop.xlane.xlu0 %1378
    %v1380 = vsel %vm219, %v1376, 0.0
    %1381 = vadd.xlane.f32.xlu0 %v1380
    %v1382 = vpop.xlane.xlu0 %1381
    %v1383 = vrcp.pop %v1379
    %v1384 = vrcp.pop %v1382
    %v1385 = vmul.f32 %v1374, %v1383
    %v1386 = vmul.f32 %v1376, %v1384
    %1387 = vrot.lane.b32.xlu0 %v198, 40
    %v1388 = vpop.permute.xlu0 %1387
    %v1391 = vsel %vm219, %v1385, 0
    %1393 = vmatprep.subr.mxu0 0.0
    %1394 = vmatpush1.msra.mxu0 %v1388
    %1395 = vmatprep.subr.mxu0 0.0
    %1396 = vmatpush1.msra.mxu0 0.0
    %1397 = vmatprep.subr.mxu0 0.0
    %1398 = vmatpush1.msra.mxu0 0.0
    %1399 = vmatprep.subr.mxu0 0.0
    %1400 = vmatpush1.msra.mxu0 0.0
    %1401 = vmatprep.subr.mxu0 0.0
    %1402 = vmatpush1.msra.mxu0 0.0
    %1403 = vmatprep.subr.mxu0 0.0
    %1404 = vmatpush1.msra.mxu0 0.0
    %1405 = vmatprep.subr.mxu0 0.0
    %1406 = vmatpush1.msra.mxu0 0.0
    %1407 = vmatprep.subr.mxu0 0.0
    %1408 = vmatpush1.msra.mxu0 0.0
    %1409 = vmatprep.subr.mxu0 0.0
    %1410 = vmatpush1.msra.mxu0 0.0
    %1411 = vmatprep.subr.mxu0 0.0
    %1412 = vmatpush1.msra.mxu0 0.0
    %1413 = vmatprep.subr.mxu0 0.0
    %1414 = vmatpush1.msra.mxu0 0.0
    %1415 = vmatprep.subr.mxu0 0.0
    %1416 = vmatpush1.msra.mxu0 0.0
    %1417 = vmatprep.subr.mxu0 0.0
    %1418 = vmatpush1.msra.mxu0 0.0
    %1419 = vmatprep.subr.mxu0 0.0
    %1420 = vmatpush1.msra.mxu0 0.0
    %1421 = vmatprep.subr.mxu0 0.0
    %1422 = vmatpush1.msra.mxu0 0.0
    %1423 = vmatprep.subr.mxu0 0.0
    %1424 = vmatpush1.msra.mxu0 0.0
    %1425 = vmatprep.subr.mxu0 0.0
    %1426 = vmatpush1.msra.mxu0 0.0
    %1427 = vmatprep.subr.mxu0 0.0
    %1428 = vmatpush1.msra.mxu0 0.0
    %1429 = vmatprep.subr.mxu0 0.0
    %1430 = vmatpush1.msra.mxu0 0.0
    %1431 = vmatprep.subr.mxu0 0.0
    %1432 = vmatpush1.msra.mxu0 0.0
    %1433 = vmatprep.subr.mxu0 0.0
    %1434 = vmatpush1.msra.mxu0 0.0
    %1435 = vmatprep.subr.mxu0 0.0
    %1436 = vmatpush1.msra.mxu0 0.0
    %1437 = vmatprep.subr.mxu0 0.0
    %1438 = vmatpush1.msra.mxu0 0.0
    %1439 = vmatprep.subr.mxu0 0.0
    %1440 = vmatpush1.msra.mxu0 0.0
    %1441 = vmatprep.subr.mxu0 0.0
    %1442 = vmatpush1.msra.mxu0 0.0
    %1443 = vmatprep.subr.mxu0 0.0
    %1444 = vmatpush1.msra.mxu0 0.0
    %1445 = vmatprep.subr.mxu0 0.0
    %1446 = vmatpush1.msra.mxu0 0.0
    %1447 = vmatprep.subr.mxu0 0.0
    %1448 = vmatpush1.msra.mxu0 0.0
    %1449 = vmatprep.subr.mxu0 0.0
    %1450 = vmatpush1.msra.mxu0 0.0
    %1451 = vmatprep.subr.mxu0 0.0
    %1452 = vmatpush1.msra.mxu0 0.0
    %1453 = vmatprep.subr.mxu0 0.0
    %1454 = vmatpush1.msra.mxu0 0.0
    %1455 = vmatprep.subr.mxu0 0.0
    %1456 = vmatpush1.msra.mxu0 0.0
    %1457 = vmatprep.mubr.f32.mxu0 0.0
    %1458 = vmatmul.mubr.f32.gmra.mrb[0].mxu0 %v1391
    %v1459 = vpop.f32.mrb[0].mxu0
    %v1460 = vadd.f32 0.0, %v1459
    %v1461 = vpop.f32.mrb[0].mxu0
    %1462 = vdwg.mxu0
    %1463 = vrot.lane.b32.xlu0 %v213, 40
    %v1464 = vpop.permute.xlu0 %1463
    %v1467 = vsel %vm219, %v1386, 0
    %1469 = vmatprep.subr.mxu0 0.0
    %1470 = vmatpush1.msra.mxu0 %v1464
    %1471 = vmatprep.subr.mxu0 0.0
    %1472 = vmatpush1.msra.mxu0 0.0
    %1473 = vmatprep.subr.mxu0 0.0
    %1474 = vmatpush1.msra.mxu0 0.0
    %1475 = vmatprep.subr.mxu0 0.0
    %1476 = vmatpush1.msra.mxu0 0.0
    %1477 = vmatprep.subr.mxu0 0.0
    %1478 = vmatpush1.msra.mxu0 0.0
    %1479 = vmatprep.subr.mxu0 0.0
    %1480 = vmatpush1.msra.mxu0 0.0
    %1481 = vmatprep.subr.mxu0 0.0
    %1482 = vmatpush1.msra.mxu0 0.0
    %1483 = vmatprep.subr.mxu0 0.0
    %1484 = vmatpush1.msra.mxu0 0.0
    %1485 = vmatprep.subr.mxu0 0.0
    %1486 = vmatpush1.msra.mxu0 0.0
    %1487 = vmatprep.subr.mxu0 0.0
    %1488 = vmatpush1.msra.mxu0 0.0
    %1489 = vmatprep.subr.mxu0 0.0
    %1490 = vmatpush1.msra.mxu0 0.0
    %1491 = vmatprep.subr.mxu0 0.0
    %1492 = vmatpush1.msra.mxu0 0.0
    %1493 = vmatprep.subr.mxu0 0.0
    %1494 = vmatpush1.msra.mxu0 0.0
    %1495 = vmatprep.subr.mxu0 0.0
    %1496 = vmatpush1.msra.mxu0 0.0
    %1497 = vmatprep.subr.mxu0 0.0
    %1498 = vmatpush1.msra.mxu0 0.0
    %1499 = vmatprep.subr.mxu0 0.0
    %1500 = vmatpush1.msra.mxu0 0.0
    %1501 = vmatprep.subr.mxu0 0.0
    %1502 = vmatpush1.msra.mxu0 0.0
    %1503 = vmatprep.subr.mxu0 0.0
    %1504 = vmatpush1.msra.mxu0 0.0
    %1505 = vmatprep.subr.mxu0 0.0
    %1506 = vmatpush1.msra.mxu0 0.0
    %1507 = vmatprep.subr.mxu0 0.0
    %1508 = vmatpush1.msra.mxu0 0.0
    %1509 = vmatprep.subr.mxu0 0.0
    %1510 = vmatpush1.msra.mxu0 0.0
    %1511 = vmatprep.subr.mxu0 0.0
    %1512 = vmatpush1.msra.mxu0 0.0
    %1513 = vmatprep.subr.mxu0 0.0
    %1514 = vmatpush1.msra.mxu0 0.0
    %1515 = vmatprep.subr.mxu0 0.0
    %1516 = vmatpush1.msra.mxu0 0.0
    %1517 = vmatprep.subr.mxu0 0.0
    %1518 = vmatpush1.msra.mxu0 0.0
    %1519 = vmatprep.subr.mxu0 0.0
    %1520 = vmatpush1.msra.mxu0 0.0
    %1521 = vmatprep.subr.mxu0 0.0
    %1522 = vmatpush1.msra.mxu0 0.0
    %1523 = vmatprep.subr.mxu0 0.0
    %1524 = vmatpush1.msra.mxu0 0.0
    %1525 = vmatprep.subr.mxu0 0.0
    %1526 = vmatpush1.msra.mxu0 0.0
    %1527 = vmatprep.subr.mxu0 0.0
    %1528 = vmatpush1.msra.mxu0 0.0
    %1529 = vmatprep.subr.mxu0 0.0
    %1530 = vmatpush1.msra.mxu0 0.0
    %1531 = vmatprep.subr.mxu0 0.0
    %1532 = vmatpush1.msra.mxu0 0.0
    %1533 = vmatprep.mubr.f32.mxu0 0.0
    %1534 = vmatmul.mubr.f32.gmra.mrb[0].mxu0 %v1467
    %v1535 = vpop.f32.mrb[0].mxu0
    %v1536 = vadd.f32 0.0, %v1535
    %v1537 = vpop.f32.mrb[0].mxu0
    %1538 = vdwg.mxu0
    %1541 = vrot.lane.b32.xlu0 %v800, 8
    %v1542 = vpop.permute.xlu0 %1541
    %1543 = vrot.lane.b32.xlu0 %v876, 8
    %v1544 = vpop.permute.xlu0 %1543
    %1549 = vrot.lane.b32.xlu0 %v1130, 16
    %v1550 = vpop.permute.xlu0 %1549
    %1551 = vrot.lane.b32.xlu0 %v1206, 16
    %v1552 = vpop.permute.xlu0 %1551
    %1557 = vrot.lane.b32.xlu0 %v1460, 24
    %v1558 = vpop.permute.xlu0 %1557
    %1559 = vrot.lane.b32.xlu0 %v1536, 24
    %v1560 = vpop.permute.xlu0 %1559
    %v1563 = vsel %vm219, %v469, %v1542
    %v1564 = vsel %vm219, %v546, %v1544
    %vm1565 = vcmask 130048
    %v1566 = vsel %vm1565, %v1563, %v1550
    %v1567 = vsel %vm1565, %v1564, %v1552
    %vm1568 = vcmask 195584
    %v1569 = vsel %vm1568, %v1566, %v1558
    %v1570 = vsel %vm1568, %v1567, %v1560
    %v1571 = vld [vmem:[#allocation10] sm:$0xff]
    %v1572 = vld [vmem:[#allocation10 + $0x8] sm:$0xff]
    %v1573 = vld [vmem:[#allocation10 + $0x10] sm:$0xff]
    %v1574 = vld [vmem:[#allocation10 + $0x18] sm:$0xff]
    %v1575 = vld [vmem:[%s5] sm:$0x1]
    %v1577 = vlaneseq
    %v1578 = vshrl.u32 %v1577, 7
    %v1579 = vsub.s32 0, %v1578
    %v1580 = vrot.slane %v1575, %v1579
    %v1583 = vsel %vm102, %v1569, 0
    %v1586 = vsel %vm102, %v1570, 0
    %1588 = vmatprep.subr.mxu0 0.0
    %1589 = vmatpush1.msra.mxu0 %v1571
    %1590 = vmatprep.subr.mxu0 0.0
    %1591 = vmatpush1.msra.mxu0 %v1572
    %1592 = vmatprep.subr.mxu0 0.0
    %1593 = vmatpush1.msra.mxu0 %v1573
    %1594 = vmatprep.subr.mxu0 0.0
    %1595 = vmatpush1.msra.mxu0 %v1574
    %1596 = vmatprep.subr.mxu0 0.0
    %1597 = vmatpush1.msra.mxu0 0.0
    %1598 = vmatprep.subr.mxu0 0.0
    %1599 = vmatpush1.msra.mxu0 0.0
    %1600 = vmatprep.subr.mxu0 0.0
    %1601 = vmatpush1.msra.mxu0 0.0
    %1602 = vmatprep.subr.mxu0 0.0
    %1603 = vmatpush1.msra.mxu0 0.0
    %1604 = vmatprep.subr.mxu0 0.0
    %1605 = vmatpush1.msra.mxu0 0.0
    %1606 = vmatprep.subr.mxu0 0.0
    %1607 = vmatpush1.msra.mxu0 0.0
    %1608 = vmatprep.subr.mxu0 0.0
    %1609 = vmatpush1.msra.mxu0 0.0
    %1610 = vmatprep.subr.mxu0 0.0
    %1611 = vmatpush1.msra.mxu0 0.0
    %1612 = vmatprep.subr.mxu0 0.0
    %1613 = vmatpush1.msra.mxu0 0.0
    %1614 = vmatprep.subr.mxu0 0.0
    %1615 = vmatpush1.msra.mxu0 0.0
    %1616 = vmatprep.subr.mxu0 0.0
    %1617 = vmatpush1.msra.mxu0 0.0
    %1618 = vmatprep.subr.mxu0 0.0
    %1619 = vmatpush1.msra.mxu0 0.0
    %1620 = vmatprep.subr.mxu0 0.0
    %1621 = vmatpush1.msra.mxu0 0.0
    %1622 = vmatprep.subr.mxu0 0.0
    %1623 = vmatpush1.msra.mxu0 0.0
    %1624 = vmatprep.subr.mxu0 0.0
    %1625 = vmatpush1.msra.mxu0 0.0
    %1626 = vmatprep.subr.mxu0 0.0
    %1627 = vmatpush1.msra.mxu0 0.0
    %1628 = vmatprep.subr.mxu0 0.0
    %1629 = vmatpush1.msra.mxu0 0.0
    %1630 = vmatprep.subr.mxu0 0.0
    %1631 = vmatpush1.msra.mxu0 0.0
    %1632 = vmatprep.subr.mxu0 0.0
    %1633 = vmatpush1.msra.mxu0 0.0
    %1634 = vmatprep.subr.mxu0 0.0
    %1635 = vmatpush1.msra.mxu0 0.0
    %1636 = vmatprep.subr.mxu0 0.0
    %1637 = vmatpush1.msra.mxu0 0.0
    %1638 = vmatprep.subr.mxu0 0.0
    %1639 = vmatpush1.msra.mxu0 0.0
    %1640 = vmatprep.subr.mxu0 0.0
    %1641 = vmatpush1.msra.mxu0 0.0
    %1642 = vmatprep.subr.mxu0 0.0
    %1643 = vmatpush1.msra.mxu0 0.0
    %1644 = vmatprep.subr.mxu0 0.0
    %1645 = vmatpush1.msra.mxu0 0.0
    %1646 = vmatprep.subr.mxu0 0.0
    %1647 = vmatpush1.msra.mxu0 0.0
    %1648 = vmatprep.subr.mxu0 0.0
    %1649 = vmatpush1.msra.mxu0 0.0
    %1650 = vmatprep.subr.mxu0 0.0
    %1651 = vmatpush1.msra.mxu0 0.0
    %1652 = vmatprep.mubr.f32.mxu0 0.0
    %1653 = vmatmul.mubr.f32.gmra.mrb[0].mxu0 %v1583
    %v1654 = vpop.f32.mrb[0].mxu0
    %v1655 = vadd.f32 %v1580, %v1654
    %v1656 = vpop.f32.mrb[0].mxu0
    %1657 = vmatprep.mubr.f32.mxu0 0.0
    %1658 = vmatmul.mubr.f32.gmra.mrb[0].mxu0 %v1586
    %v1659 = vpop.f32.mrb[0].mxu0
    %v1660 = vadd.f32 %v1580, %v1659
    %v1661 = vpop.f32.mrb[0].mxu0
    %1662 = vdwg.mxu0
    %1663 = vst.msk [vmem:[#allocation11] sm:$0xff] %vm102, %v1655
    %1664 = vst.msk [vmem:[#allocation11 + $0x8] sm:$0xff] %vm102, %v1660
    // Predicated region
    $region46: #{self_attention_pallas.1} parent=1 // pred_check
      _
    $region47: #{self_attention_pallas.1} parent=1 // pred_check_branch
      %1666 = sbr.rel (0) target = $region49
    $region48: #{self_attention_pallas.1} parent=1 // pred_region
      %s1668 = ssub.s32 256, 256
      %1669 = vsyncadd [#allocation4], %s1668
      %s1670 = sshll.u32 [#allocation11], 4
      %s1671 = int_to_ptr.vmem [resolvable:$true] %s1670
      %1676 = dma.vmem_to_hbm [thread:$0]  %s1671, 256, %s6, [#allocation4], 128, 128, 8
    $region49: #{self_attention_pallas.1} parent=1 // pred_fallthru
      _
    // Predicated region
    $region50: #{self_attention_pallas.1} parent=1 // pred_check
      _
    $region51: #{self_attention_pallas.1} parent=1 // pred_check_branch
      %1678 = sbr.rel (0) target = $region53
    $region52: #{self_attention_pallas.1} parent=1 // pred_region
      %1679 = dma.done [#allocation4], 256
    $region53: #{self_attention_pallas.1} parent=1 // pred_fallthru
      _
    %1680 = vsyncpa [#allocation3], 1
    %1681 = vsyncpa [#allocation6], 1
    %1682 = vsyncpa [#allocation9], 1
    %1683 = vsyncpa [#allocation4], 1

</llo_original>
